<compile_context>
chip_gen: v5e
topology: v5e:2x2
jax: 0.10.0
libtpu: 0.0.40
codegen_flags: <defaults>
</compile_context>

<pallas_src>
import math
import functools

import jax
import jax.numpy as jnp
from jax.experimental import pallas as pl
from jax.experimental.pallas import tpu as pltpu

_BN_EPS = 1e-5
_LANE = 128


def _round_up(x, m):
    return ((x + m - 1) // m) * m


@functools.lru_cache(maxsize=1)
def _vmem_budget():
    """Generation-aware sizing: (tile working-set budget, scoped vmem limit, max rows)."""
    cap = 64 * 1024 * 1024                      # conservative default = v7x per-core VMEM
    try:
        info = pltpu.get_tpu_info()
        cap = int(getattr(info, "vmem_capacity_bytes", cap)) or cap
    except Exception:
        pass
    limit = int(cap * 0.84)                     # ~54 MiB on v7x, ~107 MiB on v5e/v6e
    budget = max(min(int(cap * 0.45), limit - (8 << 20)), 4 << 20)
    max_rows = 8192 if cap <= (64 << 20) else 32768
    return budget, limit, max_rows


# ----------------------------------------------------------------------------
# Pallas kernel: shared per-group MLP (1x1 conv + folded BN + ReLU) + max over K.
# Grid: (M // tm, K // kc).  Axis 0 tiles groups ("parallel", megacore-friendly),
# axis 1 chunks the nsample axis ("arbitrary"); the running max is accumulated
# directly in the VMEM-resident output block (its index is constant along axis 1).
# ----------------------------------------------------------------------------
def _group_mlp_max_kernel(x_ref, *refs, n_layers):
    out_ref = refs[-1]
    param_refs = refs[:-1]

    j = pl.program_id(1)

    @pl.when(j == 0)
    def _init():
        # Post-ReLU activations are >= 0, so zero is a valid identity for max.
        out_ref[...] = jnp.zeros_like(out_ref)

    tm, kc, c0 = x_ref.shape
    x = x_ref[...].reshape(tm * kc, c0)                       # bf16
    for l in range(n_layers):
        w = param_refs[2 * l][...]                            # bf16
        b = param_refs[2 * l + 1][...]                        # f32
        y = jnp.maximum(
            jnp.dot(x, w, preferred_element_type=jnp.float32) + b, 0.0)
        x = y.astype(jnp.bfloat16) if l + 1 < n_layers else y  # keep final in f32
    c_out = x.shape[-1]
    out_ref[...] = jnp.maximum(out_ref[...],
                               jnp.max(x.reshape(tm, kc, c_out), axis=1))


def _pick_tiles(M, K, c0, layer_dims, c_last_pad, budget, max_rows):
    """Largest (tm, kc) whose estimated VMEM working set fits the budget.

    layer_dims: [(c_in, c_out)] per in-kernel layer (last one already padded).
    """
    tm_cands = [t for t in (1024, 512, 256, 128, 64, 32, 16, 8)
                if t <= M and M % t == 0]
    if not tm_cands:
        tm_cands = [M]                            # tiny M (e.g. group_all)
    multi = [t for t in tm_cands if M // t >= 2]  # keep the parallel axis >= 2 (v7x)
    if multi:
        tm_cands = multi
    kc_cands = [k for k in (256, 128, 64, 32, 16, 8) if k <= K and K % k == 0]
    if not kc_cands:
        kc_cands = [K]

    # Weights/biases: single-buffered, but count x2 as headroom.
    w_bytes = 2 * sum(ci * co * 2 + co * 4 for ci, co in layer_dims)
    c0_pad = _round_up(c0, _LANE)
    # Live activations per row: widest (bf16 operand + f32 matmul result) pair.
    act_per_row = max(_round_up(ci, _LANE) * 2 + _round_up(co, _LANE) * 4
                      for ci, co in layer_dims)

    def est(tm, kc):
        rows = tm * kc
        in_b = 2 * tm * kc * c0_pad * 2          # double-buffered bf16 input block
        act_b = rows * act_per_row               # in-kernel matmul operands
        out_b = 2 * tm * c_last_pad * 4          # resident acc + writeback buffer
        return in_b + act_b + out_b + w_bytes

    best = None
    for tm in tm_cands:
        for kc in kc_cands:
            rows = tm * kc
            if rows > max_rows or est(tm, kc) > budget:
                continue
            key = (rows, tm)                     # maximize rows, tie-break larger tm
            if best is None or key > best[0]:
                best = (key, tm, kc)
    if best is None:
        return tm_cands[-1], kc_cands[-1]
    return best[1], best[2]


def group_mlp_max(grouped, weights, biases):
    """grouped: [M, K, C0] float -> [M, C_last] f32 (per-point MLP, max over K)."""
    M, K, C0 = grouped.shape
    grouped = grouped.astype(jnp.bfloat16)

    n_layers = len(weights)
    layer_dims = [(int(w.shape[0]), int(w.shape[1])) for w in weights]
    c_last_true = layer_dims[-1][1]
    c_last_pad = _round_up(c_last_true, _LANE)

    # Only the HBM-visible final output width is zero-padded to a lane multiple
    # (lane-dense stores); padded columns stay exactly 0 through matmul + 0-bias
    # + ReLU + max and are sliced off below.  Intermediates keep true widths.
    pws = [w.astype(jnp.bfloat16) for w in weights[:-1]]
    pbs = [b.astype(jnp.float32) for b in biases[:-1]]
    w_last = jnp.zeros((layer_dims[-1][0], c_last_pad), jnp.bfloat16)
    w_last = w_last.at[:, :c_last_true].set(weights[-1].astype(jnp.bfloat16))
    b_last = jnp.zeros((1, c_last_pad), jnp.float32)
    b_last = b_last.at[:, :c_last_true].set(biases[-1].astype(jnp.float32))
    pws.append(w_last)
    pbs.append(b_last)
    kernel_dims = layer_dims[:-1] + [(layer_dims[-1][0], c_last_pad)]

    budget, vmem_limit, max_rows = _vmem_budget()
    tm, kc = _pick_tiles(M, K, C0, kernel_dims, c_last_pad, budget, max_rows)

    in_specs = [pl.BlockSpec((tm, kc, C0), lambda i, j: (i, j, 0))]
    args = [grouped]
    for wp, bp in zip(pws, pbs):
        # Constant index map -> never re-fetched; single-buffer to save VMEM.
        in_specs.append(pl.BlockSpec(wp.shape, lambda i, j: (0, 0),
                                     pipeline_mode=pl.Buffered(1)))
        in_specs.append(pl.BlockSpec(bp.shape, lambda i, j: (0, 0),
                                     pipeline_mode=pl.Buffered(1)))
        args.append(wp)
        args.append(bp)

    flops = 2 * M * K * sum(ci * co for ci, co in kernel_dims)
    bytes_accessed = (M * K * C0 * 2
                      + sum(w.size * 2 + b.size * 4 for w, b in zip(pws, pbs))
                      + M * c_last_pad * 4)

    kernel = functools.partial(_group_mlp_max_kernel, n_layers=n_layers)
    out = pl.pallas_call(
        kernel,
        out_shape=jax.ShapeDtypeStruct((M, c_last_pad), jnp.float32),
        grid=(M // tm, K // kc),
        in_specs=in_specs,
        out_specs=pl.BlockSpec((tm, c_last_pad), lambda i, j: (i, 0)),
        compiler_params=pltpu.CompilerParams(
            dimension_semantics=("parallel", "arbitrary"),
            vmem_limit_bytes=vmem_limit),
        cost_estimate=pl.CostEstimate(
            flops=int(flops), transcendentals=0,
            bytes_accessed=int(bytes_accessed)),
    )(*args)

    if c_last_pad != c_last_true:
        out = out[:, :c_last_true]
    return out


def _group_mlp_max_ref(grouped, weights, biases):
    """Pure-JAX f32 reference for the kernel (correctness check)."""
    x = grouped.astype(jnp.float32)
    for w, b in zip(weights, biases):
        x = jnp.maximum(jnp.einsum('mkc,ch->mkh', x, w) + b, 0.0)
    return jnp.max(x, axis=1)


# ----------------------------------------------------------------------------
# Glue (sampling / grouping): data-dependent gathers & sorts stay in plain JAX.
# TODO(synk): the neighbor gather could be fused into the kernel via scalar
# prefetch (PrefetchScalarGridSpec + manual per-row DMAs) to avoid the HBM
# round-trip of the grouped tensor.
# ----------------------------------------------------------------------------
def square_distance(src, dst):
    # src [B,S,3], dst [B,N,3] -> [B,S,N]
    return (jnp.sum(src ** 2, -1, keepdims=True)
            - 2.0 * jnp.einsum('bsc,bnc->bsn', src, dst)
            + jnp.sum(dst ** 2, -1)[:, None, :])


def farthest_point_sample(xyz, npoint):
    # TODO(synk): PyTorch version seeds FPS with torch.randint; we use index 0
    # deterministically.
    B, N, _ = xyz.shape

    def body(i, carry):
        centroids, distance, farthest = carry
        centroids = centroids.at[:, i].set(farthest)
        centroid = jnp.take_along_axis(xyz, farthest[:, None, None], axis=1)
        dist = jnp.sum((xyz - centroid) ** 2, -1)
        distance = jnp.minimum(distance, dist)
        farthest = jnp.argmax(distance, axis=-1).astype(jnp.int32)
        return centroids, distance, farthest

    carry0 = (jnp.zeros((B, npoint), jnp.int32),
              jnp.full((B, N), 1e10, jnp.float32),
              jnp.zeros((B,), jnp.int32))
    centroids, _, _ = jax.lax.fori_loop(0, npoint, body, carry0)
    return centroids


def index_points(points, idx):
    # points [B,N,C], idx [B,...] -> [B,...,C]
    return jax.vmap(lambda p, i: p[i])(points, idx)


def query_ball_point(radius, nsample, xyz, new_xyz):
    B, N, _ = xyz.shape
    S = new_xyz.shape[1]
    sqrdists = square_distance(new_xyz, xyz)
    group_idx = jnp.broadcast_to(
        jnp.arange(N, dtype=jnp.int32)[None, None, :], (B, S, N))
    group_idx = jnp.where(sqrdists > radius ** 2, N, group_idx)
    group_idx = jnp.sort(group_idx, axis=-1)[:, :, :nsample]
    group_first = group_idx[:, :, 0:1]
    group_idx = jnp.where(group_idx == N, group_first, group_idx)
    return group_idx


# ----------------------------------------------------------------------------
# Set-abstraction layers
# ----------------------------------------------------------------------------
def sa_msg(xyz, points, npoint, radius_list, nsample_list, branch_params):
    """PointNetSetAbstractionMsg. xyz [B,N,3], points [B,N,D] (channels-last).
    Channel order per group element matches PyTorch MSG: cat([points, xyz_rel])."""
    B, N, _ = xyz.shape
    D = points.shape[-1]
    fps_idx = farthest_point_sample(xyz, npoint)
    new_xyz = index_points(xyz, fps_idx)                      # [B,S,3]
    outs = []
    for radius, K, (ws, bs) in zip(radius_list, nsample_list, branch_params):
        gidx = query_ball_point(radius, K, xyz, new_xyz)      # [B,S,K]
        if D + 3 < 16 and len(ws) > 1:
            # Linearity of the first 1x1 conv: transform the un-grouped inputs and
            # the group centers BEFORE gathering -> the narrow, strided [M,K,6]
            # grouped tensor never hits HBM; the kernel sees 32/64-wide bf16.
            w0, b0 = ws[0], bs[0]
            w_pts, w_xyz = w0[:D], w0[D:]
            pre = points @ w_pts + xyz @ w_xyz                # [B,N,C1]
            center = new_xyz @ w_xyz                          # [B,S,C1]
            g = index_points(pre, gidx) - center[:, :, None, :] + b0
            g = jnp.maximum(g, 0.0).astype(jnp.bfloat16)      # [B,S,K,C1]
            ws_k, bs_k = ws[1:], bs[1:]
        else:
            g_xyz = index_points(xyz, gidx) - new_xyz[:, :, None, :]
            g_pts = index_points(points, gidx)
            g = jnp.concatenate([g_pts, g_xyz], axis=-1).astype(jnp.bfloat16)
            ws_k, bs_k = ws, bs
        flat = g.reshape(B * npoint, K, g.shape[-1])
        out = group_mlp_max(flat, ws_k, bs_k)                 # [B*S, Cout] f32
        outs.append(out.reshape(B, npoint, -1))
    return new_xyz, jnp.concatenate(outs, axis=-1)


def sa_group_all(xyz, points, layer_params):
    """PointNetSetAbstraction(group_all=True): cat([xyz, points]) then MLP+max.
    (sample_and_group_all puts xyz first, unlike the MSG layers.)"""
    ws, bs = layer_params
    grouped = jnp.concatenate([xyz, points], axis=-1)         # [B,N,3+D] = [M,K,C0]
    return group_mlp_max(grouped, ws, bs)                     # [B, C_last]


# ----------------------------------------------------------------------------
# Deterministic parameter init (Conv 1x1 default-ish init, eval-mode BN fold)
# ----------------------------------------------------------------------------
def _make_mlp_params(key, in_ch, mlp):
    ws, bs = [], []
    last = in_ch
    bn_scale = 1.0 / math.sqrt(1.0 + _BN_EPS)   # gamma=1, beta=0, mean=0, var=1
    for out_ch in mlp:
        key, kw, kb = jax.random.split(key, 3)
        bound = 1.0 / math.sqrt(last)
        w = jax.random.uniform(kw, (last, out_ch), jnp.float32, -bound, bound)
        b = jax.random.uniform(kb, (1, out_ch), jnp.float32, -bound, bound)
        ws.append(w * bn_scale)
        bs.append(b * bn_scale)
        last = out_ch
    return key, ws, bs


def init_params(key):
    params = {}
    sa1 = []
    for mlp in ([32, 32, 64], [64, 64, 128], [64, 96, 128]):
        key, ws, bs = _make_mlp_params(key, 3 + 3, mlp)
        sa1.append((ws, bs))
    params['sa1'] = sa1

    sa2 = []
    for mlp in ([128, 128, 256], [128, 196, 256]):
        key, ws, bs = _make_mlp_params(key, (128 + 128 + 64) + 3, mlp)
        sa2.append((ws, bs))
    params['sa2'] = sa2

    key, ws, bs = _make_mlp_params(key, 512 + 3, [256, 512, 1024])
    params['sa3'] = (ws, bs)
    return params


# ----------------------------------------------------------------------------
# Full forward (matches PointNetPlusPlus.forward: returns (None, c))
# ----------------------------------------------------------------------------
def pointnet_plus_plus_forward(xyz, params):
    # xyz: [B, N, 3]; PyTorch transposes to [B,3,N], we stay channels-last.
    l0_xyz = xyz
    l0_points = xyz
    l1_xyz, l1_points = sa_msg(l0_xyz, l0_points, 512,
                               [0.1, 0.2, 0.4], [32, 64, 128], params['sa1'])
    l2_xyz, l2_points = sa_msg(l1_xyz, l1_points, 128,
                               [0.4, 0.8], [64, 128], params['sa2'])
    c = sa_group_all(l2_xyz, l2_points, params['sa3'])        # [B, 1024]
    # TODO(synk): fp3/fp2/fp1/conv1/bn1 are declared in __init__ but never used
    # in the reference forward(); c == l3_points.squeeze().
    return None, c


if __name__ == "__main__":
    # ---- small standalone correctness check of the Pallas kernel vs f32 JAX ----
    kg, kw1, kb1, kw2, kb2 = jax.random.split(jax.random.PRNGKey(1), 5)
    g = jax.random.normal(kg, (64, 16, 35), jnp.float32)
    w1 = 0.2 * jax.random.normal(kw1, (35, 48), jnp.float32)
    b1 = 0.1 * jax.random.normal(kb1, (1, 48), jnp.float32)
    w2 = 0.2 * jax.random.normal(kw2, (48, 64), jnp.float32)
    b2 = 0.1 * jax.random.normal(kb2, (1, 64), jnp.float32)
    got = jax.jit(group_mlp_max)(g, [w1, w2], [b1, b2])
    ref = _group_mlp_max_ref(g, [w1, w2], [b1, b2])
    got, ref = jax.block_until_ready((got, ref))
    rel_err = float(jnp.max(jnp.abs(got - ref)) / (jnp.max(jnp.abs(ref)) + 1e-6))
    assert rel_err < 0.1, f"group_mlp_max mismatch vs f32 reference: {rel_err}"

    # ---- full forward ----
    key = jax.random.PRNGKey(0)
    kp, kx = jax.random.split(key)
    params = init_params(kp)

    B, N = 2, 1024   # npoint=512 / nsample up to 128 are hard-coded in the module
    xyz = jax.random.uniform(kx, (B, N, 3), jnp.float32, -1.0, 1.0)

    fwd = jax.jit(lambda x: pointnet_plus_plus_forward(x, params)[1])
    c = fwd(xyz)
    c = jax.block_until_ready(c)
    assert c.shape == (B, 1024), c.shape
    assert bool(jnp.all(jnp.isfinite(c)))
    print("KERNEL_OK")
</pallas_src>

<mosaic_0001>
module attributes {stable_mosaic.version = 11 : i64} {
  func.func @_group_mlp_max_kernel(%arg0: i32, %arg1: i32, %arg2: memref<32x16x35xbf16, #tpu.memory_space<vmem>>, %arg3: memref<35x48xbf16, #tpu.memory_space<vmem>>, %arg4: memref<1x48xf32, #tpu.memory_space<vmem>>, %arg5: memref<48x128xbf16, #tpu.memory_space<vmem>>, %arg6: memref<1x128xf32, #tpu.memory_space<vmem>>, %arg7: memref<32x128xf32, #tpu.memory_space<vmem>>) attributes {dimension_semantics = [#tpu.dimension_semantics<parallel>, #tpu.dimension_semantics<arbitrary>], iteration_bounds = array<i64: 2, 1>, scalar_prefetch = 0 : i64, scratch_operands = 0 : i64, tpu.core_type = #tpu.core_type<tc>, window_params = [{transform_indices = @transform_0, window_bounds = array<i64: 32, 16, 35>}, {pipeline_mode = #tpu.pipeline_mode<synchronous>, transform_indices = @transform_1, window_bounds = array<i64: 35, 48>}, {pipeline_mode = #tpu.pipeline_mode<synchronous>, transform_indices = @transform_2, window_bounds = array<i64: 1, 48>}, {pipeline_mode = #tpu.pipeline_mode<synchronous>, transform_indices = @transform_3, window_bounds = array<i64: 48, 128>}, {pipeline_mode = #tpu.pipeline_mode<synchronous>, transform_indices = @transform_4, window_bounds = array<i64: 1, 128>}, {transform_indices = @transform_5, window_bounds = array<i64: 32, 128>}]} {
    %c0_i32 = arith.constant 0 : i32
    %0 = arith.cmpi eq, %arg1, %c0_i32 : i32
    %1 = arith.extui %0 : i1 to i32
    %c0_i32_0 = arith.constant 0 : i32
    %2 = arith.cmpi ne, %1, %c0_i32_0 : i32
    scf.if %2 {
      %cst_19 = arith.constant 0.000000e+00 : f32
      %25 = vector.broadcast %cst_19 : f32 to vector<32x128xf32>
      %c0_20 = arith.constant 0 : index
      %c0_21 = arith.constant 0 : index
      %26 = vector.load %arg7[%c0_20, %c0_21] : memref<32x128xf32, #tpu.memory_space<vmem>>, vector<32x128xf32>
      tpu.vector_store %arg7[%c0_20, %c0_21], %25 {strides = array<i32>} : memref<32x128xf32, #tpu.memory_space<vmem>>, vector<32x128xf32>,
    } else {
    }
    %c0 = arith.constant 0 : index
    %c0_1 = arith.constant 0 : index
    %c0_2 = arith.constant 0 : index
    %3 = vector.load %arg2[%c0, %c0_1, %c0_2] : memref<32x16x35xbf16, #tpu.memory_space<vmem>>, vector<32x16x35xbf16>
    %4 = vector.shape_cast %3 : vector<32x16x35xbf16> to vector<512x35xbf16>
    %c0_3 = arith.constant 0 : index
    %c0_4 = arith.constant 0 : index
    %5 = vector.load %arg3[%c0_3, %c0_4] : memref<35x48xbf16, #tpu.memory_space<vmem>>, vector<35x48xbf16>
    %c0_5 = arith.constant 0 : index
    %c0_6 = arith.constant 0 : index
    %6 = vector.load %arg4[%c0_5, %c0_6] : memref<1x48xf32, #tpu.memory_space<vmem>>, vector<1x48xf32>
    %cst = arith.constant dense<0.000000e+00> : vector<512x48xf32>
    %7 = tpu.matmul %4, %5, %cst {dimension_numbers = #tpu.dot_dimension_numbers<[1], [0], [0], [1], [0, 0, 1, 1], [], []>} : vector<512x35xbf16>, vector<35x48xbf16>, vector<512x48xf32> -> vector<512x48xf32>
    %8 = vector.broadcast %6 : vector<1x48xf32> to vector<512x48xf32>
    %9 = arith.addf %7, %8 : vector<512x48xf32>
    %cst_7 = arith.constant 0.000000e+00 : f32
    %10 = vector.broadcast %cst_7 : f32 to vector<512x48xf32>
    %11 = arith.maximumf %9, %10 : vector<512x48xf32>
    %12 = arith.truncf %11 : vector<512x48xf32> to vector<512x48xbf16>
    %c0_8 = arith.constant 0 : index
    %c0_9 = arith.constant 0 : index
    %13 = vector.load %arg5[%c0_8, %c0_9] : memref<48x128xbf16, #tpu.memory_space<vmem>>, vector<48x128xbf16>
    %c0_10 = arith.constant 0 : index
    %c0_11 = arith.constant 0 : index
    %14 = vector.load %arg6[%c0_10, %c0_11] : memref<1x128xf32, #tpu.memory_space<vmem>>, vector<1x128xf32>
    %cst_12 = arith.constant dense<0.000000e+00> : vector<512x128xf32>
    %15 = tpu.matmul %12, %13, %cst_12 {dimension_numbers = #tpu.dot_dimension_numbers<[1], [0], [0], [1], [0, 0, 1, 1], [], []>} : vector<512x48xbf16>, vector<48x128xbf16>, vector<512x128xf32> -> vector<512x128xf32>
    %16 = vector.broadcast %14 : vector<1x128xf32> to vector<512x128xf32>
    %17 = arith.addf %15, %16 : vector<512x128xf32>
    %cst_13 = arith.constant 0.000000e+00 : f32
    %18 = vector.broadcast %cst_13 : f32 to vector<512x128xf32>
    %19 = arith.maximumf %17, %18 : vector<512x128xf32>
    %c0_14 = arith.constant 0 : index
    %c0_15 = arith.constant 0 : index
    %20 = vector.load %arg7[%c0_14, %c0_15] : memref<32x128xf32, #tpu.memory_space<vmem>>, vector<32x128xf32>
    %21 = vector.shape_cast %19 : vector<512x128xf32> to vector<32x16x128xf32>
    %cst_16 = arith.constant dense<0xFF800000> : vector<32x128xf32>
    %22 = vector.multi_reduction <maximumf>, %21, %cst_16 [1] : vector<32x16x128xf32> to vector<32x128xf32>
    %23 = arith.maximumf %20, %22 : vector<32x128xf32>
    %c0_17 = arith.constant 0 : index
    %c0_18 = arith.constant 0 : index
    %24 = vector.load %arg7[%c0_17, %c0_18] : memref<32x128xf32, #tpu.memory_space<vmem>>, vector<32x128xf32>
    tpu.vector_store %arg7[%c0_17, %c0_18], %23 {strides = array<i32>} : memref<32x128xf32, #tpu.memory_space<vmem>>, vector<32x128xf32>,
    return
  }
  func.func @transform_0(%arg0: i32, %arg1: i32) -> (i32, i32, i32) {
    %c0_i32 = arith.constant 0 : i32
    %c0_i32_0 = arith.constant 0 : i32
    return %arg0, %arg1, %c0_i32 : i32, i32, i32
  }
  func.func @transform_1(%arg0: i32, %arg1: i32) -> (i32, i32) {
    %c0_i32 = arith.constant 0 : i32
    %c0_i32_0 = arith.constant 0 : i32
    %c0_i32_1 = arith.constant 0 : i32
    return %c0_i32, %c0_i32_0 : i32, i32
  }
  func.func @transform_2(%arg0: i32, %arg1: i32) -> (i32, i32) {
    %c0_i32 = arith.constant 0 : i32
    %c0_i32_0 = arith.constant 0 : i32
    %c0_i32_1 = arith.constant 0 : i32
    return %c0_i32, %c0_i32_0 : i32, i32
  }
  func.func @transform_3(%arg0: i32, %arg1: i32) -> (i32, i32) {
    %c0_i32 = arith.constant 0 : i32
    %c0_i32_0 = arith.constant 0 : i32
    %c0_i32_1 = arith.constant 0 : i32
    return %c0_i32, %c0_i32_0 : i32, i32
  }
  func.func @transform_4(%arg0: i32, %arg1: i32) -> (i32, i32) {
    %c0_i32 = arith.constant 0 : i32
    %c0_i32_0 = arith.constant 0 : i32
    %c0_i32_1 = arith.constant 0 : i32
    return %c0_i32, %c0_i32_0 : i32, i32
  }
  func.func @transform_5(%arg0: i32, %arg1: i32) -> (i32, i32) {
    %c0_i32 = arith.constant 0 : i32
    %c0_i32_0 = arith.constant 0 : i32
    return %arg0, %c0_i32 : i32, i32
  }
}

</mosaic_0001>

<llo_original>
// kernel: group_mlp_max.1
$region0: #{group_mlp_max.1}
  #allocation0 [shape = 'u32[]', space=smem, size = 0x4, offset = 0x4, fixed_abs, tag = 'smem constant byte address 0x4 - core index']
  #allocation1 [shape = 'u32[72,128]{1,0:T(1,128)}', space=vmem, size = 0x9000, scoped, tag = 'internal scratch']
  %s0 = inlined_call_operand.vmem [shape: bf16[64,16,35], index: 0, kind: input, shape index: {}]
  %s1 = inlined_call_operand.vmem [shape: bf16[35,48], index: 1, kind: input, shape index: {}]
  %s2 = inlined_call_operand.vmem [shape: f32[1,48], index: 2, kind: input, shape index: {}]
  %s3 = inlined_call_operand.vmem [shape: bf16[48,128], index: 3, kind: input, shape index: {}]
  %s4 = inlined_call_operand.vmem [shape: f32[1,128], index: 4, kind: input, shape index: {}]
  %s5 = inlined_call_operand.hbm [shape: f32[64,128], index: 5, kind: output, shape index: {}]
  %s6 = sld [smem:[#allocation0]]
  $region57: #{group_mlp_max.1} parent=0
    _
  %s8 = ssub.s32 1, %s6
  %s9 = scalar_select 0, %s8, %s6
  $region1: #{group_mlp_max.1} parent=0
    #allocation2 [shape = 'u8[32768]{0}', space=vmem, size = 0x8000, scoped, tag = 'output window, operand 0']
    #allocation3 [shape = 's32[2]{0}', space=sflag, size = 0x8, scoped, tag = 'scoped memory for group_mlp_max.1']
    %10 = vsyncpa [#allocation3], 0
    %s11 = scalar_lea.sflag [#allocation3], 1
    %12 = vsyncpa %s11, 0
    loop: start=0, step=1, limit=4
    $region2: #{group_mlp_max.1} parent=1 // loop_pre_header
      _
    $region3: #{group_mlp_max.1} parent=1 // loop_header
      %s14 = sphi 0, %s18
      %p15 = scmp.ge.s32.totalorder %s14, 4
      %s21 = sphi 0, %s33
      %s22 = sphi 0, %s29
      %s23 = sphi 0, %s21
      %s24 = sphi 0, %s22
      %s25 = sphi 0, %s23
      %s26 = sphi 0, %s24
      %s38 = sphi 0, %s40
      %s41 = sphi 0, %s38
      %s42 = sphi 0, %s41
      %s58 = sphi 0, %s42
      %s62 = sphi 0, %s62
      %s64 = sphi 0, %s62
      %s65 = sphi 0, %s64
      %s79 = sphi 0, %s65
      %s83 = sphi 0, %s83
      %s85 = sphi 0, %s83
      %s86 = sphi 0, %s85
      %s100 = sphi 0, %s86
      %s104 = sphi 0, %s104
      %s106 = sphi 0, %s104
      %s107 = sphi 0, %s106
      %s121 = sphi 0, %s107
      %s125 = sphi 0, %s125
      %s127 = sphi 0, %s125
      %s128 = sphi 0, %s127
      %s142 = sphi 0, %s128
      %s148 = sphi 0, %s150
      %s151 = sphi 0, %s148
      %s152 = sphi 0, %s151
      %s168 = sphi 0, %s152
    $region4: #{group_mlp_max.1} parent=1 // loop_header_branch
      %17 = sbr.rel (%p15) target = $region8
    $region5: #{group_mlp_max.1} parent=1 // loop_body
      %s19 = ssub.s32 %s14, 1
      %s20 = ssub.s32 %s14, 2
      %s27 = sadd.s32 1, %s22
      %p28 = scmp.ge.s32.totalorder %s27, 1
      %s29 = scalar_select %p28, 0, %s27
      %s30 = sadd.s32 1, %s21
      %s31 = scalar_select %p28, %s30, %s21
      %p32 = scmp.ge.s32.totalorder %s31, 2
      %s33 = scalar_select %p32, 0, %s31
      %s34 = ssub.s32 %s21, %s33
      %s35 = ssub.s32 %s22, %s29
      %s36 = sor.u32 %s34, %s35
      %p37 = scmp.eq.s32.totalorder %s36, 0
      %s39 = sadd.s32 %s38, 1
      %s40 = scalar_select %p37, %s38, %s39
      %p43 = pneg %p37
      %p44 = scmp.eq.s32.totalorder %s14, 1
      %p45 = por %p43, %p44
      %p46 = scmp.ne.s32.totalorder %s38, %s41
      %p47 = scmp.eq.s32.totalorder %s14, 0
      %p48 = por %p46, %p47
      %p49 = scmp.ne.s32.totalorder %s38, %s41
      %p50 = scmp.eq.s32.totalorder %s19, 1
      %p51 = por %p49, %p50
      %p52 = scmp.ne.s32.totalorder %s41, %s42
      %p53 = scmp.eq.s32.totalorder %s19, 0
      %p54 = por %p52, %p53
      %p55 = scmp.ne.s32.totalorder %s41, %s42
      %p56 = scmp.eq.s32.totalorder %s20, 1
      %p57 = por %p55, %p56
      %p59 = scmp.ne.s32.totalorder %s42, %s58
      %p60 = scmp.eq.s32.totalorder %s20, 0
      %p61 = por %p59, %p60
      %s63 = sadd.s32 %s62, 1
      %p66 = scmp.eq.s32.totalorder %s14, 1
      %p67 = scmp.ne.s32.totalorder %s62, %s64
      %p68 = scmp.eq.s32.totalorder %s14, 0
      %p69 = por %p67, %p68
      %p70 = scmp.ne.s32.totalorder %s62, %s64
      %p71 = scmp.eq.s32.totalorder %s19, 1
      %p72 = por %p70, %p71
      %p73 = scmp.ne.s32.totalorder %s64, %s65
      %p74 = scmp.eq.s32.totalorder %s19, 0
      %p75 = por %p73, %p74
      %p76 = scmp.ne.s32.totalorder %s64, %s65
      %p77 = scmp.eq.s32.totalorder %s20, 1
      %p78 = por %p76, %p77
      %p80 = scmp.ne.s32.totalorder %s65, %s79
      %p81 = scmp.eq.s32.totalorder %s20, 0
      %p82 = por %p80, %p81
      %s84 = sadd.s32 %s83, 1
      %p87 = scmp.eq.s32.totalorder %s14, 1
      %p88 = scmp.ne.s32.totalorder %s83, %s85
      %p89 = scmp.eq.s32.totalorder %s14, 0
      %p90 = por %p88, %p89
      %p91 = scmp.ne.s32.totalorder %s83, %s85
      %p92 = scmp.eq.s32.totalorder %s19, 1
      %p93 = por %p91, %p92
      %p94 = scmp.ne.s32.totalorder %s85, %s86
      %p95 = scmp.eq.s32.totalorder %s19, 0
      %p96 = por %p94, %p95
      %p97 = scmp.ne.s32.totalorder %s85, %s86
      %p98 = scmp.eq.s32.totalorder %s20, 1
      %p99 = por %p97, %p98
      %p101 = scmp.ne.s32.totalorder %s86, %s100
      %p102 = scmp.eq.s32.totalorder %s20, 0
      %p103 = por %p101, %p102
      %s105 = sadd.s32 %s104, 1
      %p108 = scmp.eq.s32.totalorder %s14, 1
      %p109 = scmp.ne.s32.totalorder %s104, %s106
      %p110 = scmp.eq.s32.totalorder %s14, 0
      %p111 = por %p109, %p110
      %p112 = scmp.ne.s32.totalorder %s104, %s106
      %p113 = scmp.eq.s32.totalorder %s19, 1
      %p114 = por %p112, %p113
      %p115 = scmp.ne.s32.totalorder %s106, %s107
      %p116 = scmp.eq.s32.totalorder %s19, 0
      %p117 = por %p115, %p116
      %p118 = scmp.ne.s32.totalorder %s106, %s107
      %p119 = scmp.eq.s32.totalorder %s20, 1
      %p120 = por %p118, %p119
      %p122 = scmp.ne.s32.totalorder %s107, %s121
      %p123 = scmp.eq.s32.totalorder %s20, 0
      %p124 = por %p122, %p123
      %s126 = sadd.s32 %s125, 1
      %p129 = scmp.eq.s32.totalorder %s14, 1
      %p130 = scmp.ne.s32.totalorder %s125, %s127
      %p131 = scmp.eq.s32.totalorder %s14, 0
      %p132 = por %p130, %p131
      %p133 = scmp.ne.s32.totalorder %s125, %s127
      %p134 = scmp.eq.s32.totalorder %s19, 1
      %p135 = por %p133, %p134
      %p136 = scmp.ne.s32.totalorder %s127, %s128
      %p137 = scmp.eq.s32.totalorder %s19, 0
      %p138 = por %p136, %p137
      %p139 = scmp.ne.s32.totalorder %s127, %s128
      %p140 = scmp.eq.s32.totalorder %s20, 1
      %p141 = por %p139, %p140
      %p143 = scmp.ne.s32.totalorder %s128, %s142
      %p144 = scmp.eq.s32.totalorder %s20, 0
      %p145 = por %p143, %p144
      %s146 = ssub.s32 %s21, %s33
      %p147 = scmp.eq.s32.totalorder %s146, 0
      %s149 = sadd.s32 %s148, 1
      %s150 = scalar_select %p147, %s148, %s149
      %p153 = pneg %p147
      %p154 = scmp.eq.s32.totalorder %s14, 1
      %p155 = por %p153, %p154
      %p156 = scmp.ne.s32.totalorder %s148, %s151
      %p157 = scmp.eq.s32.totalorder %s14, 0
      %p158 = por %p156, %p157
      %p159 = scmp.ne.s32.totalorder %s148, %s151
      %p160 = scmp.eq.s32.totalorder %s19, 1
      %p161 = por %p159, %p160
      %p162 = scmp.ne.s32.totalorder %s151, %s152
      %p163 = scmp.eq.s32.totalorder %s19, 0
      %p164 = por %p162, %p163
      %p165 = scmp.ne.s32.totalorder %s151, %s152
      %p166 = scmp.eq.s32.totalorder %s20, 1
      %p167 = por %p165, %p166
      %p169 = scmp.ne.s32.totalorder %s152, %s168
      %p170 = scmp.eq.s32.totalorder %s20, 0
      %p171 = por %p169, %p170
      %p172 = scmp.le.s32.totalorder 1, %s14
      %p173 = scmp.lt.s32.totalorder %s14, 3
      %p174 = pnand %p172, %p173
      %p175 = pneg %p174
      // Predicated region
      $region9: #{group_mlp_max.1} parent=5 // pred_check
        _
      $region10: #{group_mlp_max.1} parent=5 // pred_check_branch
        %177 = sbr.rel (%p174) target = $region12
      $region11: #{group_mlp_max.1} parent=5 // pred_region
        %s178 = ssub.s32 %s14, 1
        // Predicated region
        $region13: #{group_mlp_max.1} parent=11 // pred_check
          %p179 = pneg %p75
        $region14: #{group_mlp_max.1} parent=11 // pred_check_branch
          %181 = sbr.rel (%p179) target = $region16
        $region15: #{group_mlp_max.1} parent=11 // pred_region
          _
        $region16: #{group_mlp_max.1} parent=11 // pred_fallthru
          _
        // Predicated region
        $region17: #{group_mlp_max.1} parent=11 // pred_check
          %p182 = pneg %p96
        $region18: #{group_mlp_max.1} parent=11 // pred_check_branch
          %184 = sbr.rel (%p182) target = $region20
        $region19: #{group_mlp_max.1} parent=11 // pred_region
          _
        $region20: #{group_mlp_max.1} parent=11 // pred_fallthru
          _
        // Predicated region
        $region21: #{group_mlp_max.1} parent=11 // pred_check
          %p185 = pneg %p117
        $region22: #{group_mlp_max.1} parent=11 // pred_check_branch
          %187 = sbr.rel (%p185) target = $region24
        $region23: #{group_mlp_max.1} parent=11 // pred_region
          _
        $region24: #{group_mlp_max.1} parent=11 // pred_fallthru
          _
        // Predicated region
        $region25: #{group_mlp_max.1} parent=11 // pred_check
          %p188 = pneg %p138
        $region26: #{group_mlp_max.1} parent=11 // pred_check_branch
          %190 = sbr.rel (%p188) target = $region28
        $region27: #{group_mlp_max.1} parent=11 // pred_region
          _
        $region28: #{group_mlp_max.1} parent=11 // pred_fallthru
          _
      $region12: #{group_mlp_max.1} parent=5 // pred_fallthru
        _
      %p191 = scmp.lt.s32.totalorder %s14, 2
      // Predicated region
      $region29: #{group_mlp_max.1} parent=5 // pred_check
        %p192 = pneg %p191
      $region30: #{group_mlp_max.1} parent=5 // pred_check_branch
        %194 = sbr.rel (%p192) target = $region32
      $region31: #{group_mlp_max.1} parent=5 // pred_region
        // Predicated region
        $region33: #{group_mlp_max.1} parent=31 // pred_check
          %p195 = pneg %p48
        $region34: #{group_mlp_max.1} parent=31 // pred_check_branch
          %197 = sbr.rel (%p195) target = $region36
        $region35: #{group_mlp_max.1} parent=31 // pred_region
          %s198 = smul.u32 32, %s21
          %s199 = smul.u32 2, %s22
          %p200 = scmp.lt.s32.totalorder %s198, 63
          %s201 = scalar_select %p200, %s198, 63
          %p202 = scmp.lt.s32.totalorder %s199, 1
          %s203 = scalar_select %p202, %s199, 1
          %s204 = smul.addr %s201, 2
          %s205 = sadd.s32 %s203, %s204
          %s206 = smul.addr %s205, 4
          %s207 = scalar_lea.vmem %s0, %s206
          %s208 = smul.u32 32, %s21
          %s209 = smul.u32 2, %s22
        $region36: #{group_mlp_max.1} parent=31 // pred_fallthru
          _
      $region32: #{group_mlp_max.1} parent=5 // pred_fallthru
        _
      %p210 = scmp.le.s32.totalorder 1, %s14
      %p211 = scmp.lt.s32.totalorder %s14, 3
      %p212 = pnand %p210, %p211
      %p213 = pneg %p212
      // Predicated region
      $region37: #{group_mlp_max.1} parent=5 // pred_check
        _
      $region38: #{group_mlp_max.1} parent=5 // pred_check_branch
        %215 = sbr.rel (%p212) target = $region40
      $region39: #{group_mlp_max.1} parent=5 // pred_region
        %s216 = ssub.s32 %s14, 1
        %s217 = smul.u32 32, %s23
        %s218 = smul.u32 2, %s24
        %p219 = scmp.lt.s32.totalorder %s217, 63
        %s220 = scalar_select %p219, %s217, 63
        %p221 = scmp.lt.s32.totalorder %s218, 1
        %s222 = scalar_select %p221, %s218, 1
        %s223 = smul.addr %s220, 2
        %s224 = sadd.s32 %s222, %s223
        %s225 = smul.addr %s224, 4
        %s226 = scalar_lea.vmem %s0, %s225
        %p227 = pneg %p54
        %p228 = pneg %p51
        %p229 = pneg %p75
        %p230 = pneg %p72
        %p231 = pneg %p96
        %p232 = pneg %p93
        %p233 = pneg %p117
        %p234 = pneg %p114
        %p235 = pneg %p138
        %p236 = pneg %p135
        %p237 = pneg %p164
        %p238 = pneg %p161
        %s239 = sand.u32 %s151, 1
        %s240 = scalar_lea.sflag [#allocation3], %s239
        %s241 = sand.u32 %s151, 1
        %s242 = smul.addr %s241, 32
        %s243 = scalar_lea.vmem [#allocation2], %s242
        %s244 = smul.u32 32, %s23
        %s245 = smul.u32 2, %s24
        %p246 = scmp.lt.s32.totalorder %s244, 63
        %s247 = scalar_select %p246, %s244, 63
        %p248 = scmp.lt.s32.totalorder %s245, 1
        %s249 = scalar_select %p248, %s245, 1
        %s250 = smul.addr %s247, 2
        %s251 = sadd.s32 %s249, %s250
        %s252 = smul.addr %s251, 4
        %s253 = scalar_lea.vmem %s0, %s252
        %s254 = smul.u32 32, %s23
        %s255 = smul.u32 2, %s24
        %s256 = smul.u32 4, %s23
        %p258 = scmp.eq.s32.totalorder %s24, 0
        // Predicated region
        $region41: #{group_mlp_max.1} parent=39 // pred_check
          %p259 = pneg %p258
        $region42: #{group_mlp_max.1} parent=39 // pred_check_branch
          %261 = sbr.rel (%p259) target = $region44
        $region43: #{group_mlp_max.1} parent=39 // pred_region
          %262 = vst [vmem:[%s243] sm:$0xff] 0.0
          %263 = vst [vmem:[%s243 + $0x8] sm:$0xff] 0.0
          %264 = vst [vmem:[%s243 + $0x10] sm:$0xff] 0.0
          %265 = vst [vmem:[%s243 + $0x18] sm:$0xff] 0.0
        $region44: #{group_mlp_max.1} parent=39 // pred_fallthru
          _
        %v266 = vld [vmem:[%s253] sm:$0xf]
        %v267 = vld [vmem:[%s253 + $0x4] sm:$0xf]
        %v268 = vld [vmem:[%s253 + $0x8] sm:$0xf]
        %v269 = vld [vmem:[%s253 + $0xc] sm:$0xf]
        %v270 = vld [vmem:[%s253 + $0x10] sm:$0xf]
        %v271 = vld [vmem:[%s253 + $0x14] sm:$0xf]
        %v272 = vld [vmem:[%s253 + $0x18] sm:$0xf]
        %v273 = vld [vmem:[%s253 + $0x1c] sm:$0xf]
        %v274 = vld [vmem:[%s253 + $0x20] sm:$0xf]
        %v275 = vld [vmem:[%s253 + $0x24] sm:$0xf]
        %v276 = vld [vmem:[%s253 + $0x28] sm:$0xf]
        %v277 = vld [vmem:[%s253 + $0x2c] sm:$0xf]
        %v278 = vld [vmem:[%s253 + $0x30] sm:$0xf]
        %v279 = vld [vmem:[%s253 + $0x34] sm:$0xf]
        %v280 = vld [vmem:[%s253 + $0x38] sm:$0xf]
        %v281 = vld [vmem:[%s253 + $0x3c] sm:$0xf]
        %v282 = vld [vmem:[%s253 + $0x40] sm:$0xf]
        %v283 = vld [vmem:[%s253 + $0x44] sm:$0xf]
        %v284 = vld [vmem:[%s253 + $0x48] sm:$0xf]
        %v285 = vld [vmem:[%s253 + $0x4c] sm:$0xf]
        %v286 = vld [vmem:[%s253 + $0x50] sm:$0xf]
        %v287 = vld [vmem:[%s253 + $0x54] sm:$0xf]
        %v288 = vld [vmem:[%s253 + $0x58] sm:$0xf]
        %v289 = vld [vmem:[%s253 + $0x5c] sm:$0xf]
        %v290 = vld [vmem:[%s253 + $0x60] sm:$0xf]
        %v291 = vld [vmem:[%s253 + $0x64] sm:$0xf]
        %v292 = vld [vmem:[%s253 + $0x68] sm:$0xf]
        %v293 = vld [vmem:[%s253 + $0x6c] sm:$0xf]
        %v294 = vld [vmem:[%s253 + $0x70] sm:$0xf]
        %v295 = vld [vmem:[%s253 + $0x74] sm:$0xf]
        %v296 = vld [vmem:[%s253 + $0x78] sm:$0xf]
        %v297 = vld [vmem:[%s253 + $0x7c] sm:$0xf]
        %v298 = vld [vmem:[%s253 + $0x80] sm:$0xf]
        %v299 = vld [vmem:[%s253 + $0x84] sm:$0xf]
        %v300 = vld [vmem:[%s253 + $0x88] sm:$0xf]
        %v301 = vld [vmem:[%s253 + $0x8c] sm:$0xf]
        %v302 = vld [vmem:[%s253 + $0x90] sm:$0xf]
        %v303 = vld [vmem:[%s253 + $0x94] sm:$0xf]
        %v304 = vld [vmem:[%s253 + $0x98] sm:$0xf]
        %v305 = vld [vmem:[%s253 + $0x9c] sm:$0xf]
        %v306 = vld [vmem:[%s253 + $0xa0] sm:$0xf]
        %v307 = vld [vmem:[%s253 + $0xa4] sm:$0xf]
        %v308 = vld [vmem:[%s253 + $0xa8] sm:$0xf]
        %v309 = vld [vmem:[%s253 + $0xac] sm:$0xf]
        %v310 = vld [vmem:[%s253 + $0xb0] sm:$0xf]
        %v311 = vld [vmem:[%s253 + $0xb4] sm:$0xf]
        %v312 = vld [vmem:[%s253 + $0xb8] sm:$0xf]
        %v313 = vld [vmem:[%s253 + $0xbc] sm:$0xf]
        %v314 = vld [vmem:[%s253 + $0xc0] sm:$0xf]
        %v315 = vld [vmem:[%s253 + $0xc4] sm:$0xf]
        %v316 = vld [vmem:[%s253 + $0xc8] sm:$0xf]
        %v317 = vld [vmem:[%s253 + $0xcc] sm:$0xf]
        %v318 = vld [vmem:[%s253 + $0xd0] sm:$0xf]
        %v319 = vld [vmem:[%s253 + $0xd4] sm:$0xf]
        %v320 = vld [vmem:[%s253 + $0xd8] sm:$0xf]
        %v321 = vld [vmem:[%s253 + $0xdc] sm:$0xf]
        %v322 = vld [vmem:[%s253 + $0xe0] sm:$0xf]
        %v323 = vld [vmem:[%s253 + $0xe4] sm:$0xf]
        %v324 = vld [vmem:[%s253 + $0xe8] sm:$0xf]
        %v325 = vld [vmem:[%s253 + $0xec] sm:$0xf]
        %v326 = vld [vmem:[%s253 + $0xf0] sm:$0xf]
        %v327 = vld [vmem:[%s253 + $0xf4] sm:$0xf]
        %v328 = vld [vmem:[%s253 + $0xf8] sm:$0xf]
        %v329 = vld [vmem:[%s253 + $0xfc] sm:$0xf]
        %v330 = vld [vmem:[%s1] sm:$0xf]
        %v331 = vld [vmem:[%s1 + $0x4] sm:$0xf]
        %v332 = vld [vmem:[%s1 + $0x8] sm:$0xf]
        %v333 = vld [vmem:[%s1 + $0xc] sm:$0xf]
        %v334 = vld [vmem:[%s1 + $0x10] sm:$0x3]
        %v335 = vld [vmem:[%s2] sm:$0x1]
        %v337 = vperm.slane %v335, 0
        %v403 = vunpack.c.l.b16 %v266
        %v404 = vunpack.c.l.b16 %v267
        %v405 = vunpack.c.l.b16 %v268
        %v406 = vunpack.c.l.b16 %v269
        %v407 = vunpack.c.l.b16 %v270
        %v408 = vunpack.c.l.b16 %v271
        %v409 = vunpack.c.l.b16 %v272
        %v410 = vunpack.c.l.b16 %v273
        %v411 = vunpack.c.l.b16 %v274
        %v412 = vunpack.c.l.b16 %v275
        %v413 = vunpack.c.l.b16 %v276
        %v414 = vunpack.c.l.b16 %v277
        %v415 = vunpack.c.l.b16 %v278
        %v416 = vunpack.c.l.b16 %v279
        %v417 = vunpack.c.l.b16 %v280
        %v418 = vunpack.c.l.b16 %v281
        %v419 = vunpack.c.l.b16 %v282
        %v420 = vunpack.c.l.b16 %v283
        %v421 = vunpack.c.l.b16 %v284
        %v422 = vunpack.c.l.b16 %v285
        %v423 = vunpack.c.l.b16 %v286
        %v424 = vunpack.c.l.b16 %v287
        %v425 = vunpack.c.l.b16 %v288
        %v426 = vunpack.c.l.b16 %v289
        %v427 = vunpack.c.l.b16 %v290
        %v428 = vunpack.c.l.b16 %v291
        %v429 = vunpack.c.l.b16 %v292
        %v430 = vunpack.c.l.b16 %v293
        %v431 = vunpack.c.l.b16 %v294
        %v432 = vunpack.c.l.b16 %v295
        %v433 = vunpack.c.l.b16 %v296
        %v434 = vunpack.c.l.b16 %v297
        %v435 = vunpack.c.l.b16 %v298
        %v436 = vunpack.c.l.b16 %v299
        %v437 = vunpack.c.l.b16 %v300
        %v438 = vunpack.c.l.b16 %v301
        %v439 = vunpack.c.l.b16 %v302
        %v440 = vunpack.c.l.b16 %v303
        %v441 = vunpack.c.l.b16 %v304
        %v442 = vunpack.c.l.b16 %v305
        %v443 = vunpack.c.l.b16 %v306
        %v444 = vunpack.c.l.b16 %v307
        %v445 = vunpack.c.l.b16 %v308
        %v446 = vunpack.c.l.b16 %v309
        %v447 = vunpack.c.l.b16 %v310
        %v448 = vunpack.c.l.b16 %v311
        %v449 = vunpack.c.l.b16 %v312
        %v450 = vunpack.c.l.b16 %v313
        %v451 = vunpack.c.l.b16 %v314
        %v452 = vunpack.c.l.b16 %v315
        %v453 = vunpack.c.l.b16 %v316
        %v454 = vunpack.c.l.b16 %v317
        %v455 = vunpack.c.l.b16 %v318
        %v456 = vunpack.c.l.b16 %v319
        %v457 = vunpack.c.l.b16 %v320
        %v458 = vunpack.c.l.b16 %v321
        %v459 = vunpack.c.l.b16 %v322
        %v460 = vunpack.c.l.b16 %v323
        %v461 = vunpack.c.l.b16 %v324
        %v462 = vunpack.c.l.b16 %v325
        %v463 = vunpack.c.l.b16 %v326
        %v464 = vunpack.c.l.b16 %v327
        %v465 = vunpack.c.l.b16 %v328
        %v466 = vunpack.c.l.b16 %v329
        %v467 = vpack.c.b16 %v404, %v403
        %v468 = vpack.c.b16 %v406, %v405
        %v469 = vpack.c.b16 %v408, %v407
        %v470 = vpack.c.b16 %v410, %v409
        %v471 = vpack.c.b16 %v412, %v411
        %v472 = vpack.c.b16 %v414, %v413
        %v473 = vpack.c.b16 %v416, %v415
        %v474 = vpack.c.b16 %v418, %v417
        %v475 = vpack.c.b16 %v420, %v419
        %v476 = vpack.c.b16 %v422, %v421
        %v477 = vpack.c.b16 %v424, %v423
        %v478 = vpack.c.b16 %v426, %v425
        %v479 = vpack.c.b16 %v428, %v427
        %v480 = vpack.c.b16 %v430, %v429
        %v481 = vpack.c.b16 %v432, %v431
        %v482 = vpack.c.b16 %v434, %v433
        %v483 = vpack.c.b16 %v436, %v435
        %v484 = vpack.c.b16 %v438, %v437
        %v485 = vpack.c.b16 %v440, %v439
        %v486 = vpack.c.b16 %v442, %v441
        %v487 = vpack.c.b16 %v444, %v443
        %v488 = vpack.c.b16 %v446, %v445
        %v489 = vpack.c.b16 %v448, %v447
        %v490 = vpack.c.b16 %v450, %v449
        %v491 = vpack.c.b16 %v452, %v451
        %v492 = vpack.c.b16 %v454, %v453
        %v493 = vpack.c.b16 %v456, %v455
        %v494 = vpack.c.b16 %v458, %v457
        %v495 = vpack.c.b16 %v460, %v459
        %v496 = vpack.c.b16 %v462, %v461
        %v497 = vpack.c.b16 %v464, %v463
        %v498 = vpack.c.b16 %v466, %v465
        %v504 = vunpack.c.l.b16 %v330
        %v505 = vunpack.c.l.b16 %v331
        %v506 = vunpack.c.l.b16 %v332
        %v507 = vunpack.c.l.b16 %v333
        %v508 = vunpack.c.l.b16 %v334
        %v509 = vpack.c.b16 %v505, %v504
        %v510 = vpack.c.b16 %v507, %v506
        %v511 = vpack.c.b16 %v508, %v508
        %vm514 = vcmask 285696
        %v516 = vsel %vm514, %v467, 0
        %v519 = vsel %vm514, %v468, 0
        %v522 = vsel %vm514, %v469, 0
        %v525 = vsel %vm514, %v470, 0
        %v528 = vsel %vm514, %v471, 0
        %v531 = vsel %vm514, %v472, 0
        %v534 = vsel %vm514, %v473, 0
        %v537 = vsel %vm514, %v474, 0
        %v540 = vsel %vm514, %v475, 0
        %v543 = vsel %vm514, %v476, 0
        %v546 = vsel %vm514, %v477, 0
        %v549 = vsel %vm514, %v478, 0
        %v552 = vsel %vm514, %v479, 0
        %v555 = vsel %vm514, %v480, 0
        %v558 = vsel %vm514, %v481, 0
        %v561 = vsel %vm514, %v482, 0
        %v564 = vsel %vm514, %v483, 0
        %v567 = vsel %vm514, %v484, 0
        %v570 = vsel %vm514, %v485, 0
        %v573 = vsel %vm514, %v486, 0
        %v576 = vsel %vm514, %v487, 0
        %v579 = vsel %vm514, %v488, 0
        %v582 = vsel %vm514, %v489, 0
        %v585 = vsel %vm514, %v490, 0
        %v588 = vsel %vm514, %v491, 0
        %v591 = vsel %vm514, %v492, 0
        %v594 = vsel %vm514, %v493, 0
        %v597 = vsel %vm514, %v494, 0
        %v600 = vsel %vm514, %v495, 0
        %v603 = vsel %vm514, %v496, 0
        %v606 = vsel %vm514, %v497, 0
        %v609 = vsel %vm514, %v498, 0
        %vm611 = vcmask 1040384
        %vm612 = vcmask 1041408
        %v613 = vsel %vm611, 4294967295, 65535
        %v614 = vsel %vm612, %v613, 0
        %v616 = vand.u32 %v511, %v614
        %618 = vmatpush.bf16.msra.mxu0 0
        %619 = vmatpush.bf16.msra.mxu0 0
        %620 = vmatpush.bf16.msra.mxu0 0
        %621 = vmatpush.bf16.msra.mxu0 0
        %622 = vmatpush.bf16.msra.mxu0 0
        %623 = vmatpush.bf16.msra.mxu0 %v616
        %624 = vmatpush.bf16.msra.mxu0 %v510
        %625 = vmatpush.bf16.msra.mxu0 %v509
        %626 = vmatmul.bf16.gmra.mxu0 %v516
        %v627 = vpop.f32.mrf.mxu0
        %v628 = vadd.f32 %v337, %v627
        %v629 = vpop.f32.mrf.mxu0
        %v630 = vadd.f32 %v337, %v629
        %631 = vmatmul.bf16.gmra.mxu0 %v519
        %v632 = vpop.f32.mrf.mxu0
        %v633 = vadd.f32 %v337, %v632
        %v634 = vpop.f32.mrf.mxu0
        %v635 = vadd.f32 %v337, %v634
        %636 = vmatmul.bf16.gmra.mxu0 %v522
        %v637 = vpop.f32.mrf.mxu0
        %v638 = vadd.f32 %v337, %v637
        %v639 = vpop.f32.mrf.mxu0
        %v640 = vadd.f32 %v337, %v639
        %641 = vmatmul.bf16.gmra.mxu0 %v525
        %v642 = vpop.f32.mrf.mxu0
        %v643 = vadd.f32 %v337, %v642
        %v644 = vpop.f32.mrf.mxu0
        %v645 = vadd.f32 %v337, %v644
        %646 = vmatmul.bf16.gmra.mxu0 %v528
        %v647 = vpop.f32.mrf.mxu0
        %v648 = vadd.f32 %v337, %v647
        %v649 = vpop.f32.mrf.mxu0
        %v650 = vadd.f32 %v337, %v649
        %651 = vmatmul.bf16.gmra.mxu0 %v531
        %v652 = vpop.f32.mrf.mxu0
        %v653 = vadd.f32 %v337, %v652
        %v654 = vpop.f32.mrf.mxu0
        %v655 = vadd.f32 %v337, %v654
        %656 = vmatmul.bf16.gmra.mxu0 %v534
        %v657 = vpop.f32.mrf.mxu0
        %v658 = vadd.f32 %v337, %v657
        %v659 = vpop.f32.mrf.mxu0
        %v660 = vadd.f32 %v337, %v659
        %661 = vmatmul.bf16.gmra.mxu0 %v537
        %v662 = vpop.f32.mrf.mxu0
        %v663 = vadd.f32 %v337, %v662
        %v664 = vpop.f32.mrf.mxu0
        %v665 = vadd.f32 %v337, %v664
        %666 = vmatmul.bf16.gmra.mxu0 %v540
        %v667 = vpop.f32.mrf.mxu0
        %v668 = vadd.f32 %v337, %v667
        %v669 = vpop.f32.mrf.mxu0
        %v670 = vadd.f32 %v337, %v669
        %671 = vmatmul.bf16.gmra.mxu0 %v543
        %v672 = vpop.f32.mrf.mxu0
        %v673 = vadd.f32 %v337, %v672
        %v674 = vpop.f32.mrf.mxu0
        %v675 = vadd.f32 %v337, %v674
        %676 = vmatmul.bf16.gmra.mxu0 %v546
        %v677 = vpop.f32.mrf.mxu0
        %v678 = vadd.f32 %v337, %v677
        %v679 = vpop.f32.mrf.mxu0
        %v680 = vadd.f32 %v337, %v679
        %681 = vmatmul.bf16.gmra.mxu0 %v549
        %v682 = vpop.f32.mrf.mxu0
        %v683 = vadd.f32 %v337, %v682
        %v684 = vpop.f32.mrf.mxu0
        %v685 = vadd.f32 %v337, %v684
        %686 = vmatmul.bf16.gmra.mxu0 %v552
        %v687 = vpop.f32.mrf.mxu0
        %v688 = vadd.f32 %v337, %v687
        %v689 = vpop.f32.mrf.mxu0
        %v690 = vadd.f32 %v337, %v689
        %691 = vmatmul.bf16.gmra.mxu0 %v555
        %v692 = vpop.f32.mrf.mxu0
        %v693 = vadd.f32 %v337, %v692
        %v694 = vpop.f32.mrf.mxu0
        %v695 = vadd.f32 %v337, %v694
        %696 = vmatmul.bf16.gmra.mxu0 %v558
        %v697 = vpop.f32.mrf.mxu0
        %v698 = vadd.f32 %v337, %v697
        %v699 = vpop.f32.mrf.mxu0
        %v700 = vadd.f32 %v337, %v699
        %701 = vmatmul.bf16.gmra.mxu0 %v561
        %v702 = vpop.f32.mrf.mxu0
        %v703 = vadd.f32 %v337, %v702
        %v704 = vpop.f32.mrf.mxu0
        %v705 = vadd.f32 %v337, %v704
        %706 = vmatmul.bf16.gmra.mxu0 %v564
        %v707 = vpop.f32.mrf.mxu0
        %v708 = vadd.f32 %v337, %v707
        %v709 = vpop.f32.mrf.mxu0
        %v710 = vadd.f32 %v337, %v709
        %711 = vmatmul.bf16.gmra.mxu0 %v567
        %v712 = vpop.f32.mrf.mxu0
        %v713 = vadd.f32 %v337, %v712
        %v714 = vpop.f32.mrf.mxu0
        %v715 = vadd.f32 %v337, %v714
        %716 = vmatmul.bf16.gmra.mxu0 %v570
        %v717 = vpop.f32.mrf.mxu0
        %v718 = vadd.f32 %v337, %v717
        %v719 = vpop.f32.mrf.mxu0
        %v720 = vadd.f32 %v337, %v719
        %721 = vmatmul.bf16.gmra.mxu0 %v573
        %v722 = vpop.f32.mrf.mxu0
        %v723 = vadd.f32 %v337, %v722
        %v724 = vpop.f32.mrf.mxu0
        %v725 = vadd.f32 %v337, %v724
        %726 = vmatmul.bf16.gmra.mxu0 %v576
        %v727 = vpop.f32.mrf.mxu0
        %v728 = vadd.f32 %v337, %v727
        %v729 = vpop.f32.mrf.mxu0
        %v730 = vadd.f32 %v337, %v729
        %731 = vmatmul.bf16.gmra.mxu0 %v579
        %v732 = vpop.f32.mrf.mxu0
        %v733 = vadd.f32 %v337, %v732
        %v734 = vpop.f32.mrf.mxu0
        %v735 = vadd.f32 %v337, %v734
        %736 = vmatmul.bf16.gmra.mxu0 %v582
        %v737 = vpop.f32.mrf.mxu0
        %v738 = vadd.f32 %v337, %v737
        %v739 = vpop.f32.mrf.mxu0
        %v740 = vadd.f32 %v337, %v739
        %741 = vmatmul.bf16.gmra.mxu0 %v585
        %v742 = vpop.f32.mrf.mxu0
        %v743 = vadd.f32 %v337, %v742
        %v744 = vpop.f32.mrf.mxu0
        %v745 = vadd.f32 %v337, %v744
        %746 = vmatmul.bf16.gmra.mxu0 %v588
        %v747 = vpop.f32.mrf.mxu0
        %v748 = vadd.f32 %v337, %v747
        %v749 = vpop.f32.mrf.mxu0
        %v750 = vadd.f32 %v337, %v749
        %751 = vmatmul.bf16.gmra.mxu0 %v591
        %v752 = vpop.f32.mrf.mxu0
        %v753 = vadd.f32 %v337, %v752
        %v754 = vpop.f32.mrf.mxu0
        %v755 = vadd.f32 %v337, %v754
        %756 = vmatmul.bf16.gmra.mxu0 %v594
        %v757 = vpop.f32.mrf.mxu0
        %v758 = vadd.f32 %v337, %v757
        %v759 = vpop.f32.mrf.mxu0
        %v760 = vadd.f32 %v337, %v759
        %761 = vmatmul.bf16.gmra.mxu0 %v597
        %v762 = vpop.f32.mrf.mxu0
        %v763 = vadd.f32 %v337, %v762
        %v764 = vpop.f32.mrf.mxu0
        %v765 = vadd.f32 %v337, %v764
        %766 = vmatmul.bf16.gmra.mxu0 %v600
        %v767 = vpop.f32.mrf.mxu0
        %v768 = vadd.f32 %v337, %v767
        %v769 = vpop.f32.mrf.mxu0
        %v770 = vadd.f32 %v337, %v769
        %771 = vmatmul.bf16.gmra.mxu0 %v603
        %v772 = vpop.f32.mrf.mxu0
        %v773 = vadd.f32 %v337, %v772
        %v774 = vpop.f32.mrf.mxu0
        %v775 = vadd.f32 %v337, %v774
        %776 = vmatmul.bf16.gmra.mxu0 %v606
        %v777 = vpop.f32.mrf.mxu0
        %v778 = vadd.f32 %v337, %v777
        %v779 = vpop.f32.mrf.mxu0
        %v780 = vadd.f32 %v337, %v779
        %781 = vmatmul.bf16.gmra.mxu0 %v609
        %v782 = vpop.f32.mrf.mxu0
        %v783 = vadd.f32 %v337, %v782
        %v784 = vpop.f32.mrf.mxu0
        %v785 = vadd.f32 %v337, %v784
        %786 = vdwg.mxu0
        %v787 = vmax.f32 %v628, 0.0
        %v788 = vmax.f32 %v630, 0.0
        %v789 = vmax.f32 %v633, 0.0
        %v790 = vmax.f32 %v635, 0.0
        %v791 = vmax.f32 %v638, 0.0
        %v792 = vmax.f32 %v640, 0.0
        %v793 = vmax.f32 %v643, 0.0
        %v794 = vmax.f32 %v645, 0.0
        %v795 = vmax.f32 %v648, 0.0
        %v796 = vmax.f32 %v650, 0.0
        %v797 = vmax.f32 %v653, 0.0
        %v798 = vmax.f32 %v655, 0.0
        %v799 = vmax.f32 %v658, 0.0
        %v800 = vmax.f32 %v660, 0.0
        %v801 = vmax.f32 %v663, 0.0
        %v802 = vmax.f32 %v665, 0.0
        %v803 = vmax.f32 %v668, 0.0
        %v804 = vmax.f32 %v670, 0.0
        %v805 = vmax.f32 %v673, 0.0
        %v806 = vmax.f32 %v675, 0.0
        %v807 = vmax.f32 %v678, 0.0
        %v808 = vmax.f32 %v680, 0.0
        %v809 = vmax.f32 %v683, 0.0
        %v810 = vmax.f32 %v685, 0.0
        %v811 = vmax.f32 %v688, 0.0
        %v812 = vmax.f32 %v690, 0.0
        %v813 = vmax.f32 %v693, 0.0
        %v814 = vmax.f32 %v695, 0.0
        %v815 = vmax.f32 %v698, 0.0
        %v816 = vmax.f32 %v700, 0.0
        %v817 = vmax.f32 %v703, 0.0
        %v818 = vmax.f32 %v705, 0.0
        %v819 = vmax.f32 %v708, 0.0
        %v820 = vmax.f32 %v710, 0.0
        %v821 = vmax.f32 %v713, 0.0
        %v822 = vmax.f32 %v715, 0.0
        %v823 = vmax.f32 %v718, 0.0
        %v824 = vmax.f32 %v720, 0.0
        %v825 = vmax.f32 %v723, 0.0
        %v826 = vmax.f32 %v725, 0.0
        %v827 = vmax.f32 %v728, 0.0
        %v828 = vmax.f32 %v730, 0.0
        %v829 = vmax.f32 %v733, 0.0
        %v830 = vmax.f32 %v735, 0.0
        %v831 = vmax.f32 %v738, 0.0
        %v832 = vmax.f32 %v740, 0.0
        %v833 = vmax.f32 %v743, 0.0
        %v834 = vmax.f32 %v745, 0.0
        %v835 = vmax.f32 %v748, 0.0
        %v836 = vmax.f32 %v750, 0.0
        %v837 = vmax.f32 %v753, 0.0
        %v838 = vmax.f32 %v755, 0.0
        %v839 = vmax.f32 %v758, 0.0
        %v840 = vmax.f32 %v760, 0.0
        %v841 = vmax.f32 %v763, 0.0
        %v842 = vmax.f32 %v765, 0.0
        %v843 = vmax.f32 %v768, 0.0
        %v844 = vmax.f32 %v770, 0.0
        %v845 = vmax.f32 %v773, 0.0
        %v846 = vmax.f32 %v775, 0.0
        %v847 = vmax.f32 %v778, 0.0
        %v848 = vmax.f32 %v780, 0.0
        %v849 = vmax.f32 %v783, 0.0
        %v850 = vmax.f32 %v785, 0.0
        %v851 = vpack.c.bf16 %v788, %v787
        %v852 = vpack.c.bf16 %v790, %v789
        %v853 = vpack.c.bf16 %v792, %v791
        %v854 = vpack.c.bf16 %v794, %v793
        %v855 = vpack.c.bf16 %v796, %v795
        %v856 = vpack.c.bf16 %v798, %v797
        %v857 = vpack.c.bf16 %v800, %v799
        %v858 = vpack.c.bf16 %v802, %v801
        %v859 = vpack.c.bf16 %v804, %v803
        %v860 = vpack.c.bf16 %v806, %v805
        %v861 = vpack.c.bf16 %v808, %v807
        %v862 = vpack.c.bf16 %v810, %v809
        %v863 = vpack.c.bf16 %v812, %v811
        %v864 = vpack.c.bf16 %v814, %v813
        %v865 = vpack.c.bf16 %v816, %v815
        %v866 = vpack.c.bf16 %v818, %v817
        %v867 = vpack.c.bf16 %v820, %v819
        %v868 = vpack.c.bf16 %v822, %v821
        %v869 = vpack.c.bf16 %v824, %v823
        %v870 = vpack.c.bf16 %v826, %v825
        %v871 = vpack.c.bf16 %v828, %v827
        %v872 = vpack.c.bf16 %v830, %v829
        %v873 = vpack.c.bf16 %v832, %v831
        %v874 = vpack.c.bf16 %v834, %v833
        %v875 = vpack.c.bf16 %v836, %v835
        %v876 = vpack.c.bf16 %v838, %v837
        %v877 = vpack.c.bf16 %v840, %v839
        %v878 = vpack.c.bf16 %v842, %v841
        %v879 = vpack.c.bf16 %v844, %v843
        %v880 = vpack.c.bf16 %v846, %v845
        %v881 = vpack.c.bf16 %v848, %v847
        %v882 = vpack.c.bf16 %v850, %v849
        %v883 = vld [vmem:[%s3] sm:$0xf]
        %v884 = vld [vmem:[%s3 + $0x4] sm:$0xf]
        %v885 = vld [vmem:[%s3 + $0x8] sm:$0xf]
        %v886 = vld [vmem:[%s3 + $0xc] sm:$0xf]
        %v887 = vld [vmem:[%s3 + $0x10] sm:$0xf]
        %v888 = vld [vmem:[%s3 + $0x14] sm:$0xf]
        %v889 = vld [vmem:[%s4] sm:$0x1]
        %v891 = vperm.slane %v889, 0
        %v899 = vunpack.c.l.b16 %v883
        %v900 = vunpack.c.l.b16 %v884
        %v901 = vunpack.c.l.b16 %v885
        %v902 = vunpack.c.l.b16 %v886
        %v903 = vunpack.c.l.b16 %v887
        %v904 = vunpack.c.l.b16 %v888
        %v905 = vpack.c.b16 %v900, %v899
        %v906 = vpack.c.b16 %v902, %v901
        %v907 = vpack.c.b16 %v904, %v903
        %vm911 = vcmask 392192
        %v913 = vsel %vm911, %v851, 0
        %v916 = vsel %vm911, %v852, 0
        %v919 = vsel %vm911, %v853, 0
        %v922 = vsel %vm911, %v854, 0
        %v925 = vsel %vm911, %v855, 0
        %v928 = vsel %vm911, %v856, 0
        %v931 = vsel %vm911, %v857, 0
        %v934 = vsel %vm911, %v858, 0
        %v937 = vsel %vm911, %v859, 0
        %v940 = vsel %vm911, %v860, 0
        %v943 = vsel %vm911, %v861, 0
        %v946 = vsel %vm911, %v862, 0
        %v949 = vsel %vm911, %v863, 0
        %v952 = vsel %vm911, %v864, 0
        %v955 = vsel %vm911, %v865, 0
        %v958 = vsel %vm911, %v866, 0
        %v961 = vsel %vm911, %v867, 0
        %v964 = vsel %vm911, %v868, 0
        %v967 = vsel %vm911, %v869, 0
        %v970 = vsel %vm911, %v870, 0
        %v973 = vsel %vm911, %v871, 0
        %v976 = vsel %vm911, %v872, 0
        %v979 = vsel %vm911, %v873, 0
        %v982 = vsel %vm911, %v874, 0
        %v985 = vsel %vm911, %v875, 0
        %v988 = vsel %vm911, %v876, 0
        %v991 = vsel %vm911, %v877, 0
        %v994 = vsel %vm911, %v878, 0
        %v997 = vsel %vm911, %v879, 0
        %v1000 = vsel %vm911, %v880, 0
        %v1003 = vsel %vm911, %v881, 0
        %v1006 = vsel %vm911, %v882, 0
        %1008 = vmatpush.bf16.msra.mxu0 0
        %1009 = vmatpush.bf16.msra.mxu0 0
        %1010 = vmatpush.bf16.msra.mxu0 0
        %1011 = vmatpush.bf16.msra.mxu0 0
        %1012 = vmatpush.bf16.msra.mxu0 0
        %1013 = vmatpush.bf16.msra.mxu0 %v907
        %1014 = vmatpush.bf16.msra.mxu0 %v906
        %1015 = vmatpush.bf16.msra.mxu0 %v905
        %1016 = vmatmul.bf16.gmra.mxu0 %v913
        %v1017 = vpop.f32.mrf.mxu0
        %v1018 = vadd.f32 %v891, %v1017
        %v1019 = vpop.f32.mrf.mxu0
        %v1020 = vadd.f32 %v891, %v1019
        %1021 = vmatmul.bf16.gmra.mxu0 %v916
        %v1022 = vpop.f32.mrf.mxu0
        %v1023 = vadd.f32 %v891, %v1022
        %v1024 = vpop.f32.mrf.mxu0
        %v1025 = vadd.f32 %v891, %v1024
        %1026 = vmatmul.bf16.gmra.mxu0 %v919
        %v1027 = vpop.f32.mrf.mxu0
        %v1028 = vadd.f32 %v891, %v1027
        %v1029 = vpop.f32.mrf.mxu0
        %v1030 = vadd.f32 %v891, %v1029
        %1031 = vmatmul.bf16.gmra.mxu0 %v922
        %v1032 = vpop.f32.mrf.mxu0
        %v1033 = vadd.f32 %v891, %v1032
        %v1034 = vpop.f32.mrf.mxu0
        %v1035 = vadd.f32 %v891, %v1034
        %1036 = vmatmul.bf16.gmra.mxu0 %v925
        %v1037 = vpop.f32.mrf.mxu0
        %v1038 = vadd.f32 %v891, %v1037
        %v1039 = vpop.f32.mrf.mxu0
        %v1040 = vadd.f32 %v891, %v1039
        %1041 = vmatmul.bf16.gmra.mxu0 %v928
        %v1042 = vpop.f32.mrf.mxu0
        %v1043 = vadd.f32 %v891, %v1042
        %v1044 = vpop.f32.mrf.mxu0
        %v1045 = vadd.f32 %v891, %v1044
        %1046 = vmatmul.bf16.gmra.mxu0 %v931
        %v1047 = vpop.f32.mrf.mxu0
        %v1048 = vadd.f32 %v891, %v1047
        %v1049 = vpop.f32.mrf.mxu0
        %v1050 = vadd.f32 %v891, %v1049
        %1051 = vmatmul.bf16.gmra.mxu0 %v934
        %v1052 = vpop.f32.mrf.mxu0
        %v1053 = vadd.f32 %v891, %v1052
        %v1054 = vpop.f32.mrf.mxu0
        %v1055 = vadd.f32 %v891, %v1054
        %1056 = vmatmul.bf16.gmra.mxu0 %v937
        %v1057 = vpop.f32.mrf.mxu0
        %v1058 = vadd.f32 %v891, %v1057
        %v1059 = vpop.f32.mrf.mxu0
        %v1060 = vadd.f32 %v891, %v1059
        %1061 = vmatmul.bf16.gmra.mxu0 %v940
        %v1062 = vpop.f32.mrf.mxu0
        %v1063 = vadd.f32 %v891, %v1062
        %v1064 = vpop.f32.mrf.mxu0
        %v1065 = vadd.f32 %v891, %v1064
        %1066 = vmatmul.bf16.gmra.mxu0 %v943
        %v1067 = vpop.f32.mrf.mxu0
        %v1068 = vadd.f32 %v891, %v1067
        %v1069 = vpop.f32.mrf.mxu0
        %v1070 = vadd.f32 %v891, %v1069
        %1071 = vmatmul.bf16.gmra.mxu0 %v946
        %v1072 = vpop.f32.mrf.mxu0
        %v1073 = vadd.f32 %v891, %v1072
        %v1074 = vpop.f32.mrf.mxu0
        %v1075 = vadd.f32 %v891, %v1074
        %1076 = vmatmul.bf16.gmra.mxu0 %v949
        %v1077 = vpop.f32.mrf.mxu0
        %v1078 = vadd.f32 %v891, %v1077
        %v1079 = vpop.f32.mrf.mxu0
        %v1080 = vadd.f32 %v891, %v1079
        %1081 = vmatmul.bf16.gmra.mxu0 %v952
        %v1082 = vpop.f32.mrf.mxu0
        %v1083 = vadd.f32 %v891, %v1082
        %v1084 = vpop.f32.mrf.mxu0
        %v1085 = vadd.f32 %v891, %v1084
        %1086 = vmatmul.bf16.gmra.mxu0 %v955
        %v1087 = vpop.f32.mrf.mxu0
        %v1088 = vadd.f32 %v891, %v1087
        %v1089 = vpop.f32.mrf.mxu0
        %v1090 = vadd.f32 %v891, %v1089
        %1091 = vmatmul.bf16.gmra.mxu0 %v958
        %v1092 = vpop.f32.mrf.mxu0
        %v1093 = vadd.f32 %v891, %v1092
        %v1094 = vpop.f32.mrf.mxu0
        %v1095 = vadd.f32 %v891, %v1094
        %1096 = vmatmul.bf16.gmra.mxu0 %v961
        %v1097 = vpop.f32.mrf.mxu0
        %v1098 = vadd.f32 %v891, %v1097
        %v1099 = vpop.f32.mrf.mxu0
        %v1100 = vadd.f32 %v891, %v1099
        %1101 = vmatmul.bf16.gmra.mxu0 %v964
        %v1102 = vpop.f32.mrf.mxu0
        %v1103 = vadd.f32 %v891, %v1102
        %v1104 = vpop.f32.mrf.mxu0
        %v1105 = vadd.f32 %v891, %v1104
        %1106 = vmatmul.bf16.gmra.mxu0 %v967
        %v1107 = vpop.f32.mrf.mxu0
        %v1108 = vadd.f32 %v891, %v1107
        %v1109 = vpop.f32.mrf.mxu0
        %v1110 = vadd.f32 %v891, %v1109
        %1111 = vmatmul.bf16.gmra.mxu0 %v970
        %v1112 = vpop.f32.mrf.mxu0
        %v1113 = vadd.f32 %v891, %v1112
        %v1114 = vpop.f32.mrf.mxu0
        %v1115 = vadd.f32 %v891, %v1114
        %1116 = vmatmul.bf16.gmra.mxu0 %v973
        %v1117 = vpop.f32.mrf.mxu0
        %v1118 = vadd.f32 %v891, %v1117
        %v1119 = vpop.f32.mrf.mxu0
        %v1120 = vadd.f32 %v891, %v1119
        %1121 = vmatmul.bf16.gmra.mxu0 %v976
        %v1122 = vpop.f32.mrf.mxu0
        %v1123 = vadd.f32 %v891, %v1122
        %v1124 = vpop.f32.mrf.mxu0
        %v1125 = vadd.f32 %v891, %v1124
        %1126 = vmatmul.bf16.gmra.mxu0 %v979
        %v1127 = vpop.f32.mrf.mxu0
        %v1128 = vadd.f32 %v891, %v1127
        %v1129 = vpop.f32.mrf.mxu0
        %v1130 = vadd.f32 %v891, %v1129
        %1131 = vmatmul.bf16.gmra.mxu0 %v982
        %v1132 = vpop.f32.mrf.mxu0
        %v1133 = vadd.f32 %v891, %v1132
        %v1134 = vpop.f32.mrf.mxu0
        %v1135 = vadd.f32 %v891, %v1134
        %1136 = vmatmul.bf16.gmra.mxu0 %v985
        %v1137 = vpop.f32.mrf.mxu0
        %v1138 = vadd.f32 %v891, %v1137
        %v1139 = vpop.f32.mrf.mxu0
        %v1140 = vadd.f32 %v891, %v1139
        %1141 = vmatmul.bf16.gmra.mxu0 %v988
        %v1142 = vpop.f32.mrf.mxu0
        %v1143 = vadd.f32 %v891, %v1142
        %v1144 = vpop.f32.mrf.mxu0
        %v1145 = vadd.f32 %v891, %v1144
        %1146 = vmatmul.bf16.gmra.mxu0 %v991
        %v1147 = vpop.f32.mrf.mxu0
        %v1148 = vadd.f32 %v891, %v1147
        %v1149 = vpop.f32.mrf.mxu0
        %v1150 = vadd.f32 %v891, %v1149
        %1151 = vmatmul.bf16.gmra.mxu0 %v994
        %v1152 = vpop.f32.mrf.mxu0
        %v1153 = vadd.f32 %v891, %v1152
        %v1154 = vpop.f32.mrf.mxu0
        %v1155 = vadd.f32 %v891, %v1154
        %1156 = vmatmul.bf16.gmra.mxu0 %v997
        %v1157 = vpop.f32.mrf.mxu0
        %v1158 = vadd.f32 %v891, %v1157
        %v1159 = vpop.f32.mrf.mxu0
        %v1160 = vadd.f32 %v891, %v1159
        %1161 = vmatmul.bf16.gmra.mxu0 %v1000
        %v1162 = vpop.f32.mrf.mxu0
        %v1163 = vadd.f32 %v891, %v1162
        %v1164 = vpop.f32.mrf.mxu0
        %v1165 = vadd.f32 %v891, %v1164
        %1166 = vmatmul.bf16.gmra.mxu0 %v1003
        %v1167 = vpop.f32.mrf.mxu0
        %v1168 = vadd.f32 %v891, %v1167
        %v1169 = vpop.f32.mrf.mxu0
        %v1170 = vadd.f32 %v891, %v1169
        %1171 = vmatmul.bf16.gmra.mxu0 %v1006
        %v1172 = vpop.f32.mrf.mxu0
        %v1173 = vadd.f32 %v891, %v1172
        %v1174 = vpop.f32.mrf.mxu0
        %v1175 = vadd.f32 %v891, %v1174
        %1176 = vdwg.mxu0
        %v1177 = vmax.f32 %v1018, 0.0
        %v1178 = vmax.f32 %v1020, 0.0
        %v1179 = vmax.f32 %v1023, 0.0
        %v1180 = vmax.f32 %v1025, 0.0
        %v1181 = vmax.f32 %v1028, 0.0
        %v1182 = vmax.f32 %v1030, 0.0
        %v1183 = vmax.f32 %v1033, 0.0
        %v1184 = vmax.f32 %v1035, 0.0
        %v1185 = vmax.f32 %v1038, 0.0
        %v1186 = vmax.f32 %v1040, 0.0
        %v1187 = vmax.f32 %v1043, 0.0
        %v1188 = vmax.f32 %v1045, 0.0
        %v1189 = vmax.f32 %v1048, 0.0
        %v1190 = vmax.f32 %v1050, 0.0
        %v1191 = vmax.f32 %v1053, 0.0
        %v1192 = vmax.f32 %v1055, 0.0
        %v1193 = vmax.f32 %v1058, 0.0
        %v1194 = vmax.f32 %v1060, 0.0
        %v1195 = vmax.f32 %v1063, 0.0
        %v1196 = vmax.f32 %v1065, 0.0
        %v1197 = vmax.f32 %v1068, 0.0
        %v1198 = vmax.f32 %v1070, 0.0
        %v1199 = vmax.f32 %v1073, 0.0
        %v1200 = vmax.f32 %v1075, 0.0
        %v1201 = vmax.f32 %v1078, 0.0
        %v1202 = vmax.f32 %v1080, 0.0
        %v1203 = vmax.f32 %v1083, 0.0
        %v1204 = vmax.f32 %v1085, 0.0
        %v1205 = vmax.f32 %v1088, 0.0
        %v1206 = vmax.f32 %v1090, 0.0
        %v1207 = vmax.f32 %v1093, 0.0
        %v1208 = vmax.f32 %v1095, 0.0
        %v1209 = vmax.f32 %v1098, 0.0
        %v1210 = vmax.f32 %v1100, 0.0
        %v1211 = vmax.f32 %v1103, 0.0
        %v1212 = vmax.f32 %v1105, 0.0
        %v1213 = vmax.f32 %v1108, 0.0
        %v1214 = vmax.f32 %v1110, 0.0
        %v1215 = vmax.f32 %v1113, 0.0
        %v1216 = vmax.f32 %v1115, 0.0
        %v1217 = vmax.f32 %v1118, 0.0
        %v1218 = vmax.f32 %v1120, 0.0
        %v1219 = vmax.f32 %v1123, 0.0
        %v1220 = vmax.f32 %v1125, 0.0
        %v1221 = vmax.f32 %v1128, 0.0
        %v1222 = vmax.f32 %v1130, 0.0
        %v1223 = vmax.f32 %v1133, 0.0
        %v1224 = vmax.f32 %v1135, 0.0
        %v1225 = vmax.f32 %v1138, 0.0
        %v1226 = vmax.f32 %v1140, 0.0
        %v1227 = vmax.f32 %v1143, 0.0
        %v1228 = vmax.f32 %v1145, 0.0
        %v1229 = vmax.f32 %v1148, 0.0
        %v1230 = vmax.f32 %v1150, 0.0
        %v1231 = vmax.f32 %v1153, 0.0
        %v1232 = vmax.f32 %v1155, 0.0
        %v1233 = vmax.f32 %v1158, 0.0
        %v1234 = vmax.f32 %v1160, 0.0
        %v1235 = vmax.f32 %v1163, 0.0
        %v1236 = vmax.f32 %v1165, 0.0
        %v1237 = vmax.f32 %v1168, 0.0
        %v1238 = vmax.f32 %v1170, 0.0
        %v1239 = vmax.f32 %v1173, 0.0
        %v1240 = vmax.f32 %v1175, 0.0
        %v1241 = vld [vmem:[%s243] sm:$0xff]
        %v1242 = vld [vmem:[%s243 + $0x8] sm:$0xff]
        %v1243 = vld [vmem:[%s243 + $0x10] sm:$0xff]
        %v1244 = vld [vmem:[%s243 + $0x18] sm:$0xff]
        %v1245 = vmax.f32 %v1177, %v1178
        %v1246 = vrot.slane %v1245, 4
        %v1247 = vmax.f32 %v1245, %v1246
        %v1248 = vrot.slane %v1247, 2
        %v1249 = vmax.f32 %v1247, %v1248
        %v1250 = vrot.slane %v1249, 1
        %v1251 = vmax.f32 %v1249, %v1250
        %v1252 = vmax.f32 %v1179, %v1180
        %v1253 = vrot.slane %v1252, 4
        %v1254 = vmax.f32 %v1252, %v1253
        %v1255 = vrot.slane %v1254, 2
        %v1256 = vmax.f32 %v1254, %v1255
        %v1257 = vrot.slane %v1256, 1
        %v1258 = vmax.f32 %v1256, %v1257
        %v1259 = vmax.f32 %v1181, %v1182
        %v1260 = vrot.slane %v1259, 4
        %v1261 = vmax.f32 %v1259, %v1260
        %v1262 = vrot.slane %v1261, 2
        %v1263 = vmax.f32 %v1261, %v1262
        %v1264 = vrot.slane %v1263, 1
        %v1265 = vmax.f32 %v1263, %v1264
        %v1266 = vmax.f32 %v1183, %v1184
        %v1267 = vrot.slane %v1266, 4
        %v1268 = vmax.f32 %v1266, %v1267
        %v1269 = vrot.slane %v1268, 2
        %v1270 = vmax.f32 %v1268, %v1269
        %v1271 = vrot.slane %v1270, 1
        %v1272 = vmax.f32 %v1270, %v1271
        %v1273 = vmax.f32 %v1185, %v1186
        %v1274 = vrot.slane %v1273, 4
        %v1275 = vmax.f32 %v1273, %v1274
        %v1276 = vrot.slane %v1275, 2
        %v1277 = vmax.f32 %v1275, %v1276
        %v1278 = vrot.slane %v1277, 1
        %v1279 = vmax.f32 %v1277, %v1278
        %v1280 = vmax.f32 %v1187, %v1188
        %v1281 = vrot.slane %v1280, 4
        %v1282 = vmax.f32 %v1280, %v1281
        %v1283 = vrot.slane %v1282, 2
        %v1284 = vmax.f32 %v1282, %v1283
        %v1285 = vrot.slane %v1284, 1
        %v1286 = vmax.f32 %v1284, %v1285
        %v1287 = vmax.f32 %v1189, %v1190
        %v1288 = vrot.slane %v1287, 4
        %v1289 = vmax.f32 %v1287, %v1288
        %v1290 = vrot.slane %v1289, 2
        %v1291 = vmax.f32 %v1289, %v1290
        %v1292 = vrot.slane %v1291, 1
        %v1293 = vmax.f32 %v1291, %v1292
        %v1294 = vmax.f32 %v1191, %v1192
        %v1295 = vrot.slane %v1294, 4
        %v1296 = vmax.f32 %v1294, %v1295
        %v1297 = vrot.slane %v1296, 2
        %v1298 = vmax.f32 %v1296, %v1297
        %v1299 = vrot.slane %v1298, 1
        %v1300 = vmax.f32 %v1298, %v1299
        %v1301 = vmax.f32 %v1193, %v1194
        %v1302 = vrot.slane %v1301, 4
        %v1303 = vmax.f32 %v1301, %v1302
        %v1304 = vrot.slane %v1303, 2
        %v1305 = vmax.f32 %v1303, %v1304
        %v1306 = vrot.slane %v1305, 1
        %v1307 = vmax.f32 %v1305, %v1306
        %v1308 = vmax.f32 %v1195, %v1196
        %v1309 = vrot.slane %v1308, 4
        %v1310 = vmax.f32 %v1308, %v1309
        %v1311 = vrot.slane %v1310, 2
        %v1312 = vmax.f32 %v1310, %v1311
        %v1313 = vrot.slane %v1312, 1
        %v1314 = vmax.f32 %v1312, %v1313
        %v1315 = vmax.f32 %v1197, %v1198
        %v1316 = vrot.slane %v1315, 4
        %v1317 = vmax.f32 %v1315, %v1316
        %v1318 = vrot.slane %v1317, 2
        %v1319 = vmax.f32 %v1317, %v1318
        %v1320 = vrot.slane %v1319, 1
        %v1321 = vmax.f32 %v1319, %v1320
        %v1322 = vmax.f32 %v1199, %v1200
        %v1323 = vrot.slane %v1322, 4
        %v1324 = vmax.f32 %v1322, %v1323
        %v1325 = vrot.slane %v1324, 2
        %v1326 = vmax.f32 %v1324, %v1325
        %v1327 = vrot.slane %v1326, 1
        %v1328 = vmax.f32 %v1326, %v1327
        %v1329 = vmax.f32 %v1201, %v1202
        %v1330 = vrot.slane %v1329, 4
        %v1331 = vmax.f32 %v1329, %v1330
        %v1332 = vrot.slane %v1331, 2
        %v1333 = vmax.f32 %v1331, %v1332
        %v1334 = vrot.slane %v1333, 1
        %v1335 = vmax.f32 %v1333, %v1334
        %v1336 = vmax.f32 %v1203, %v1204
        %v1337 = vrot.slane %v1336, 4
        %v1338 = vmax.f32 %v1336, %v1337
        %v1339 = vrot.slane %v1338, 2
        %v1340 = vmax.f32 %v1338, %v1339
        %v1341 = vrot.slane %v1340, 1
        %v1342 = vmax.f32 %v1340, %v1341
        %v1343 = vmax.f32 %v1205, %v1206
        %v1344 = vrot.slane %v1343, 4
        %v1345 = vmax.f32 %v1343, %v1344
        %v1346 = vrot.slane %v1345, 2
        %v1347 = vmax.f32 %v1345, %v1346
        %v1348 = vrot.slane %v1347, 1
        %v1349 = vmax.f32 %v1347, %v1348
        %v1350 = vmax.f32 %v1207, %v1208
        %v1351 = vrot.slane %v1350, 4
        %v1352 = vmax.f32 %v1350, %v1351
        %v1353 = vrot.slane %v1352, 2
        %v1354 = vmax.f32 %v1352, %v1353
        %v1355 = vrot.slane %v1354, 1
        %v1356 = vmax.f32 %v1354, %v1355
        %v1357 = vmax.f32 %v1209, %v1210
        %v1358 = vrot.slane %v1357, 4
        %v1359 = vmax.f32 %v1357, %v1358
        %v1360 = vrot.slane %v1359, 2
        %v1361 = vmax.f32 %v1359, %v1360
        %v1362 = vrot.slane %v1361, 1
        %v1363 = vmax.f32 %v1361, %v1362
        %v1364 = vmax.f32 %v1211, %v1212
        %v1365 = vrot.slane %v1364, 4
        %v1366 = vmax.f32 %v1364, %v1365
        %v1367 = vrot.slane %v1366, 2
        %v1368 = vmax.f32 %v1366, %v1367
        %v1369 = vrot.slane %v1368, 1
        %v1370 = vmax.f32 %v1368, %v1369
        %v1371 = vmax.f32 %v1213, %v1214
        %v1372 = vrot.slane %v1371, 4
        %v1373 = vmax.f32 %v1371, %v1372
        %v1374 = vrot.slane %v1373, 2
        %v1375 = vmax.f32 %v1373, %v1374
        %v1376 = vrot.slane %v1375, 1
        %v1377 = vmax.f32 %v1375, %v1376
        %v1378 = vmax.f32 %v1215, %v1216
        %v1379 = vrot.slane %v1378, 4
        %v1380 = vmax.f32 %v1378, %v1379
        %v1381 = vrot.slane %v1380, 2
        %v1382 = vmax.f32 %v1380, %v1381
        %v1383 = vrot.slane %v1382, 1
        %v1384 = vmax.f32 %v1382, %v1383
        %v1385 = vmax.f32 %v1217, %v1218
        %v1386 = vrot.slane %v1385, 4
        %v1387 = vmax.f32 %v1385, %v1386
        %v1388 = vrot.slane %v1387, 2
        %v1389 = vmax.f32 %v1387, %v1388
        %v1390 = vrot.slane %v1389, 1
        %v1391 = vmax.f32 %v1389, %v1390
        %v1392 = vmax.f32 %v1219, %v1220
        %v1393 = vrot.slane %v1392, 4
        %v1394 = vmax.f32 %v1392, %v1393
        %v1395 = vrot.slane %v1394, 2
        %v1396 = vmax.f32 %v1394, %v1395
        %v1397 = vrot.slane %v1396, 1
        %v1398 = vmax.f32 %v1396, %v1397
        %v1399 = vmax.f32 %v1221, %v1222
        %v1400 = vrot.slane %v1399, 4
        %v1401 = vmax.f32 %v1399, %v1400
        %v1402 = vrot.slane %v1401, 2
        %v1403 = vmax.f32 %v1401, %v1402
        %v1404 = vrot.slane %v1403, 1
        %v1405 = vmax.f32 %v1403, %v1404
        %v1406 = vmax.f32 %v1223, %v1224
        %v1407 = vrot.slane %v1406, 4
        %v1408 = vmax.f32 %v1406, %v1407
        %v1409 = vrot.slane %v1408, 2
        %v1410 = vmax.f32 %v1408, %v1409
        %v1411 = vrot.slane %v1410, 1
        %v1412 = vmax.f32 %v1410, %v1411
        %v1413 = vmax.f32 %v1225, %v1226
        %v1414 = vrot.slane %v1413, 4
        %v1415 = vmax.f32 %v1413, %v1414
        %v1416 = vrot.slane %v1415, 2
        %v1417 = vmax.f32 %v1415, %v1416
        %v1418 = vrot.slane %v1417, 1
        %v1419 = vmax.f32 %v1417, %v1418
        %v1420 = vmax.f32 %v1227, %v1228
        %v1421 = vrot.slane %v1420, 4
        %v1422 = vmax.f32 %v1420, %v1421
        %v1423 = vrot.slane %v1422, 2
        %v1424 = vmax.f32 %v1422, %v1423
        %v1425 = vrot.slane %v1424, 1
        %v1426 = vmax.f32 %v1424, %v1425
        %v1427 = vmax.f32 %v1229, %v1230
        %v1428 = vrot.slane %v1427, 4
        %v1429 = vmax.f32 %v1427, %v1428
        %v1430 = vrot.slane %v1429, 2
        %v1431 = vmax.f32 %v1429, %v1430
        %v1432 = vrot.slane %v1431, 1
        %v1433 = vmax.f32 %v1431, %v1432
        %v1434 = vmax.f32 %v1231, %v1232
        %v1435 = vrot.slane %v1434, 4
        %v1436 = vmax.f32 %v1434, %v1435
        %v1437 = vrot.slane %v1436, 2
        %v1438 = vmax.f32 %v1436, %v1437
        %v1439 = vrot.slane %v1438, 1
        %v1440 = vmax.f32 %v1438, %v1439
        %v1441 = vmax.f32 %v1233, %v1234
        %v1442 = vrot.slane %v1441, 4
        %v1443 = vmax.f32 %v1441, %v1442
        %v1444 = vrot.slane %v1443, 2
        %v1445 = vmax.f32 %v1443, %v1444
        %v1446 = vrot.slane %v1445, 1
        %v1447 = vmax.f32 %v1445, %v1446
        %v1448 = vmax.f32 %v1235, %v1236
        %v1449 = vrot.slane %v1448, 4
        %v1450 = vmax.f32 %v1448, %v1449
        %v1451 = vrot.slane %v1450, 2
        %v1452 = vmax.f32 %v1450, %v1451
        %v1453 = vrot.slane %v1452, 1
        %v1454 = vmax.f32 %v1452, %v1453
        %v1455 = vmax.f32 %v1237, %v1238
        %v1456 = vrot.slane %v1455, 4
        %v1457 = vmax.f32 %v1455, %v1456
        %v1458 = vrot.slane %v1457, 2
        %v1459 = vmax.f32 %v1457, %v1458
        %v1460 = vrot.slane %v1459, 1
        %v1461 = vmax.f32 %v1459, %v1460
        %v1462 = vmax.f32 %v1239, %v1240
        %v1463 = vrot.slane %v1462, 4
        %v1464 = vmax.f32 %v1462, %v1463
        %v1465 = vrot.slane %v1464, 2
        %v1466 = vmax.f32 %v1464, %v1465
        %v1467 = vrot.slane %v1466, 1
        %v1468 = vmax.f32 %v1466, %v1467
        %vm1501 = vcmask 1041409
        %v1502 = vsel %vm1501, %v1258, %v1251
        %vm1503 = vcmask 1042434
        %v1504 = vsel %vm1503, %v1265, %v1502
        %vm1505 = vcmask 1043459
        %v1506 = vsel %vm1505, %v1272, %v1504
        %vm1507 = vcmask 1044484
        %v1508 = vsel %vm1507, %v1279, %v1506
        %vm1509 = vcmask 1045509
        %v1510 = vsel %vm1509, %v1286, %v1508
        %vm1511 = vcmask 1046534
        %v1512 = vsel %vm1511, %v1293, %v1510
        %vm1513 = vcmask 1047559
        %v1514 = vsel %vm1513, %v1300, %v1512
        %v1515 = vsel %vm1501, %v1314, %v1307
        %v1516 = vsel %vm1503, %v1321, %v1515
        %v1517 = vsel %vm1505, %v1328, %v1516
        %v1518 = vsel %vm1507, %v1335, %v1517
        %v1519 = vsel %vm1509, %v1342, %v1518
        %v1520 = vsel %vm1511, %v1349, %v1519
        %v1521 = vsel %vm1513, %v1356, %v1520
        %v1522 = vsel %vm1501, %v1370, %v1363
        %v1523 = vsel %vm1503, %v1377, %v1522
        %v1524 = vsel %vm1505, %v1384, %v1523
        %v1525 = vsel %vm1507, %v1391, %v1524
        %v1526 = vsel %vm1509, %v1398, %v1525
        %v1527 = vsel %vm1511, %v1405, %v1526
        %v1528 = vsel %vm1513, %v1412, %v1527
        %v1529 = vsel %vm1501, %v1426, %v1419
        %v1530 = vsel %vm1503, %v1433, %v1529
        %v1531 = vsel %vm1505, %v1440, %v1530
        %v1532 = vsel %vm1507, %v1447, %v1531
        %v1533 = vsel %vm1509, %v1454, %v1532
        %v1534 = vsel %vm1511, %v1461, %v1533
        %v1535 = vsel %vm1513, %v1468, %v1534
        %v1540 = vmax.f32 %v1241, %v1514
        %v1541 = vmax.f32 %v1242, %v1521
        %v1542 = vmax.f32 %v1243, %v1528
        %v1543 = vmax.f32 %v1244, %v1535
        %1544 = vst [vmem:[%s243] sm:$0xff] %v1540
        %1545 = vst [vmem:[%s243 + $0x8] sm:$0xff] %v1541
        %1546 = vst [vmem:[%s243 + $0x10] sm:$0xff] %v1542
        %1547 = vst [vmem:[%s243 + $0x18] sm:$0xff] %v1543
        %s1548 = sand.u32 %s151, 1
        %s1549 = scalar_lea.sflag [#allocation3], %s1548
        %s1550 = sand.u32 %s151, 1
        %s1551 = smul.addr %s1550, 32
        %s1552 = scalar_lea.vmem [#allocation2], %s1551
        // Predicated region
        $region45: #{group_mlp_max.1} parent=39 // pred_check
          %p1553 = pneg %p161
        $region46: #{group_mlp_max.1} parent=39 // pred_check_branch
          %1555 = sbr.rel (%p1553) target = $region48
        $region47: #{group_mlp_max.1} parent=39 // pred_region
          %s1556 = smul.u32 4, %s23
          %1558 = vsyncadd %s1549, 0
          %s1559 = smul.addr %s1556, 8
          %s1560 = scalar_lea.hbm %s5, %s1559
          %s1561 = sshll.u32 %s1552, 4
          %s1562 = int_to_ptr.vmem [resolvable:$true] %s1561
          %s1563 = sshll.u32 %s1560, 4
          %s1564 = int_to_ptr.hbm [resolvable:$true] %s1563
          %1569 = dma.vmem_to_hbm [thread:$0]  %s1562, 512, %s1564, %s1549, 128, 128, 8
        $region48: #{group_mlp_max.1} parent=39 // pred_fallthru
          _
      $region40: #{group_mlp_max.1} parent=5 // pred_fallthru
        _
      %p1570 = scmp.le.s32.totalorder 2, %s14
      // Predicated region
      $region49: #{group_mlp_max.1} parent=5 // pred_check
        %p1571 = pneg %p1570
      $region50: #{group_mlp_max.1} parent=5 // pred_check_branch
        %1573 = sbr.rel (%p1571) target = $region52
      $region51: #{group_mlp_max.1} parent=5 // pred_region
        %s1574 = ssub.s32 %s14, 2
        // Predicated region
        $region53: #{group_mlp_max.1} parent=51 // pred_check
          %p1575 = pneg %p167
        $region54: #{group_mlp_max.1} parent=51 // pred_check_branch
          %1577 = sbr.rel (%p1575) target = $region56
        $region55: #{group_mlp_max.1} parent=51 // pred_region
          %s1578 = sand.u32 %s152, 1
          %s1579 = scalar_lea.sflag [#allocation3], %s1578
          %s1580 = sand.u32 %s152, 1
          %s1581 = smul.addr %s1580, 32
          %s1582 = scalar_lea.vmem [#allocation2], %s1581
          %1584 = dma.done %s1579, 512
        $region56: #{group_mlp_max.1} parent=51 // pred_fallthru
          _
      $region52: #{group_mlp_max.1} parent=5 // pred_fallthru
        _
    $region6: #{group_mlp_max.1} parent=1 // loop_footer
      %s18 = sadd.s32 1, %s14
    $region7: #{group_mlp_max.1} parent=1 // loop_footer_branch
      %13 = sbr.rel target = $region3
    $region8: #{group_mlp_max.1} parent=1 // loop_exit
      _
    %1585 = vsyncpa [#allocation3], 1
    %s1586 = scalar_lea.sflag [#allocation3], 1
    %1587 = vsyncpa %s1586, 1

</llo_original>
